<compile_context>
chip_gen: v6e
topology: v6e:2x2x1
jax: 0.10.0
libtpu: 0.0.40
codegen_flags: <defaults>
</compile_context>

<pallas_src>
import jax
import jax.numpy as jnp
from jax.experimental import pallas as pl
from jax.experimental.pallas import tpu as pltpu

D_IN, H1, H2, D_OUT = 2048, 256, 64, 2
TB_DEFAULT = 256  # batch tile: multiple of 128; matches v6e/v7x 256-wide MXU


def _round_up(n, m):
    return (n + m - 1) // m * m


def _mlp_kernel(x_ref, w1_ref, b1_ref, w2_ref, b2_ref, w3_ref, b3_ref, o_ref):
    # bf16 on the MXU, f32 accumulation; elementwise work (bias, ReLU, softmax)
    # kept in f32 (v5e VPU/EUP have no bf16 path).
    x = x_ref[...].astype(jnp.bfloat16)                                   # (TB, 2048)
    h1 = jnp.dot(x, w1_ref[...], preferred_element_type=jnp.float32) + b1_ref[...]
    h1 = jnp.maximum(h1, 0.0)                                             # ReLU
    h2 = jnp.dot(h1.astype(jnp.bfloat16), w2_ref[...],
                 preferred_element_type=jnp.float32) + b2_ref[...]
    h2 = jnp.maximum(h2, 0.0)                                             # ReLU
    logits = jnp.dot(h2.astype(jnp.bfloat16), w3_ref[...],
                     preferred_element_type=jnp.float32) + b3_ref[...]
    # softmax over the class axis (dim=1 in the PyTorch module), f32
    m = jnp.max(logits, axis=-1, keepdims=True)
    e = jnp.exp(logits - m)
    denom = jnp.sum(e, axis=-1, keepdims=True)
    o_ref[...] = e * pl.reciprocal(denom, approx=True)                    # EUP recip


def simple_net_forward(x, params, *, tb=TB_DEFAULT):
    """x: any shape with total elements divisible by 2048 (mirrors view(-1, 2048))."""
    w1, b1, w2, b2, w3, b3 = params
    x2d = x.reshape(-1, D_IN).astype(jnp.float32)
    B = x2d.shape[0]

    # Don't over-pad tiny batches: cap the tile at the (8-aligned) batch size.
    tb = max(8, min(tb, _round_up(B, 8)))
    Bp = _round_up(B, tb)
    if Bp != B:
        x2d = jnp.pad(x2d, ((0, Bp - B), (0, 0)))

    # bf16 weights for the MXU (halves weight VMEM + HBM traffic); f32 biases.
    w1b, w2b, w3b = (w.astype(jnp.bfloat16) for w in (w1, w2, w3))

    grid = (Bp // tb,)
    # Constant (0,0) block index across the grid => weights/biases are DMA'd
    # once and stay resident in VMEM for all batch tiles.
    full = lambda shape: pl.BlockSpec(shape, lambda i: (0, 0))

    out = pl.pallas_call(
        _mlp_kernel,
        out_shape=jax.ShapeDtypeStruct((Bp, D_OUT), jnp.float32),
        grid_spec=pltpu.PrefetchScalarGridSpec(
            num_scalar_prefetch=0,
            grid=grid,
            in_specs=[
                pl.BlockSpec((tb, D_IN), lambda i: (i, 0)),   # x tile
                full((D_IN, H1)),                             # W1 (bf16)
                full((1, H1)),                                # b1 (f32)
                full((H1, H2)),                               # W2 (bf16)
                full((1, H2)),                                # b2 (f32)
                full((H2, D_OUT)),                            # W3 (bf16)
                full((1, D_OUT)),                             # b3 (f32)
            ],
            out_specs=pl.BlockSpec((tb, D_OUT), lambda i: (i, 0)),
        ),
        compiler_params=pltpu.CompilerParams(
            # Batch axis is data-parallel -> shards across the 2 TCs on v7x
            # whenever the grid has >= 2 steps.
            dimension_semantics=("parallel",)
        ),
    )(x2d, w1b, b1, w2b, b2, w3b, b3)
    return out[:B]


def init_params(key):
    """Deterministic parameter init (uniform, PyTorch-Linear-like bounds), f32."""
    ks = jax.random.split(key, 6)

    def linear(kw, kb, fan_in, fan_out):
        bound = 1.0 / jnp.sqrt(float(fan_in))
        w = jax.random.uniform(kw, (fan_in, fan_out), jnp.float32, -bound, bound)
        b = jax.random.uniform(kb, (1, fan_out), jnp.float32, -bound, bound)
        return w, b

    w1, b1 = linear(ks[0], ks[1], D_IN, H1)
    w2, b2 = linear(ks[2], ks[3], H1, H2)
    w3, b3 = linear(ks[4], ks[5], H2, D_OUT)
    return (w1, b1, w2, b2, w3, b3)


if __name__ == "__main__":
    key = jax.random.PRNGKey(0)
    kp, kx = jax.random.split(key)
    params = init_params(kp)

    # Input: (2, 4, 2048) -> view(-1, 2048) gives a batch of 8 rows.
    x = jax.random.normal(kx, (2, 4, D_IN), dtype=jnp.float32)

    out = simple_net_forward(x, params)
    out = jax.block_until_ready(out)

    # sanity: shape (8, 2) and rows sum to ~1 (softmax; approx-reciprocal tolerance)
    assert out.shape == (8, D_OUT)
    assert jnp.allclose(jnp.sum(out, axis=-1), 1.0, atol=5e-3)
    assert bool(jnp.all(jnp.isfinite(out)))

    print("KERNEL_OK")
</pallas_src>

<mosaic_0001>
module attributes {stable_mosaic.version = 11 : i64} {
  func.func @_mlp_kernel(%arg0: i32, %arg1: memref<8x2048xf32, #tpu.memory_space<vmem>>, %arg2: memref<2048x256xbf16, #tpu.memory_space<vmem>>, %arg3: memref<1x256xf32, #tpu.memory_space<vmem>>, %arg4: memref<256x64xbf16, #tpu.memory_space<vmem>>, %arg5: memref<1x64xf32, #tpu.memory_space<vmem>>, %arg6: memref<64x2xbf16, #tpu.memory_space<vmem>>, %arg7: memref<1x2xf32, #tpu.memory_space<vmem>>, %arg8: memref<8x2xf32, #tpu.memory_space<vmem>>) attributes {dimension_semantics = [#tpu.dimension_semantics<parallel>], iteration_bounds = array<i64: 1>, scalar_prefetch = 0 : i64, scratch_operands = 0 : i64, tpu.core_type = #tpu.core_type<tc>, window_params = [{transform_indices = @transform_0, window_bounds = array<i64: 8, 2048>}, {pipeline_mode = #tpu.pipeline_mode<synchronous>, transform_indices = @transform_1, window_bounds = array<i64: 2048, 256>}, {pipeline_mode = #tpu.pipeline_mode<synchronous>, transform_indices = @transform_2, window_bounds = array<i64: 1, 256>}, {pipeline_mode = #tpu.pipeline_mode<synchronous>, transform_indices = @transform_3, window_bounds = array<i64: 256, 64>}, {pipeline_mode = #tpu.pipeline_mode<synchronous>, transform_indices = @transform_4, window_bounds = array<i64: 1, 64>}, {pipeline_mode = #tpu.pipeline_mode<synchronous>, transform_indices = @transform_5, window_bounds = array<i64: 64, 2>}, {pipeline_mode = #tpu.pipeline_mode<synchronous>, transform_indices = @transform_6, window_bounds = array<i64: 1, 2>}, {transform_indices = @transform_7, window_bounds = array<i64: 8, 2>}]} {
    %c0 = arith.constant 0 : index
    %c0_0 = arith.constant 0 : index
    %0 = vector.load %arg1[%c0, %c0_0] : memref<8x2048xf32, #tpu.memory_space<vmem>>, vector<8x2048xf32>
    %1 = arith.truncf %0 : vector<8x2048xf32> to vector<8x2048xbf16>
    %c0_1 = arith.constant 0 : index
    %c0_2 = arith.constant 0 : index
    %2 = vector.load %arg2[%c0_1, %c0_2] : memref<2048x256xbf16, #tpu.memory_space<vmem>>, vector<2048x256xbf16>
    %cst = arith.constant dense<0.000000e+00> : vector<8x256xf32>
    %3 = tpu.matmul %1, %2, %cst {dimension_numbers = #tpu.dot_dimension_numbers<[1], [0], [0], [1], [0, 0, 1, 1], [], []>} : vector<8x2048xbf16>, vector<2048x256xbf16>, vector<8x256xf32> -> vector<8x256xf32>
    %c0_3 = arith.constant 0 : index
    %c0_4 = arith.constant 0 : index
    %4 = vector.load %arg3[%c0_3, %c0_4] : memref<1x256xf32, #tpu.memory_space<vmem>>, vector<1x256xf32>
    %5 = vector.broadcast %4 : vector<1x256xf32> to vector<8x256xf32>
    %6 = arith.addf %3, %5 : vector<8x256xf32>
    %cst_5 = arith.constant 0.000000e+00 : f32
    %7 = vector.broadcast %cst_5 : f32 to vector<8x256xf32>
    %8 = arith.maximumf %6, %7 : vector<8x256xf32>
    %9 = arith.truncf %8 : vector<8x256xf32> to vector<8x256xbf16>
    %c0_6 = arith.constant 0 : index
    %c0_7 = arith.constant 0 : index
    %10 = vector.load %arg4[%c0_6, %c0_7] : memref<256x64xbf16, #tpu.memory_space<vmem>>, vector<256x64xbf16>
    %cst_8 = arith.constant dense<0.000000e+00> : vector<8x64xf32>
    %11 = tpu.matmul %9, %10, %cst_8 {dimension_numbers = #tpu.dot_dimension_numbers<[1], [0], [0], [1], [0, 0, 1, 1], [], []>} : vector<8x256xbf16>, vector<256x64xbf16>, vector<8x64xf32> -> vector<8x64xf32>
    %c0_9 = arith.constant 0 : index
    %c0_10 = arith.constant 0 : index
    %12 = vector.load %arg5[%c0_9, %c0_10] : memref<1x64xf32, #tpu.memory_space<vmem>>, vector<1x64xf32>
    %13 = vector.broadcast %12 : vector<1x64xf32> to vector<8x64xf32>
    %14 = arith.addf %11, %13 : vector<8x64xf32>
    %cst_11 = arith.constant 0.000000e+00 : f32
    %15 = vector.broadcast %cst_11 : f32 to vector<8x64xf32>
    %16 = arith.maximumf %14, %15 : vector<8x64xf32>
    %17 = arith.truncf %16 : vector<8x64xf32> to vector<8x64xbf16>
    %c0_12 = arith.constant 0 : index
    %c0_13 = arith.constant 0 : index
    %18 = vector.load %arg6[%c0_12, %c0_13] : memref<64x2xbf16, #tpu.memory_space<vmem>>, vector<64x2xbf16>
    %cst_14 = arith.constant dense<0.000000e+00> : vector<8x2xf32>
    %19 = tpu.matmul %17, %18, %cst_14 {dimension_numbers = #tpu.dot_dimension_numbers<[1], [0], [0], [1], [0, 0, 1, 1], [], []>} : vector<8x64xbf16>, vector<64x2xbf16>, vector<8x2xf32> -> vector<8x2xf32>
    %c0_15 = arith.constant 0 : index
    %c0_16 = arith.constant 0 : index
    %20 = vector.load %arg7[%c0_15, %c0_16] : memref<1x2xf32, #tpu.memory_space<vmem>>, vector<1x2xf32>
    %21 = vector.broadcast %20 : vector<1x2xf32> to vector<8x2xf32>
    %22 = arith.addf %19, %21 : vector<8x2xf32>
    %cst_17 = arith.constant dense<0xFF800000> : vector<8xf32>
    %23 = vector.multi_reduction <maximumf>, %22, %cst_17 [1] : vector<8x2xf32> to vector<8xf32>
    %24 = vector.shape_cast %23 : vector<8xf32> to vector<8x1xf32>
    %25 = vector.broadcast %24 : vector<8x1xf32> to vector<8x2xf32>
    %26 = arith.subf %22, %25 : vector<8x2xf32>
    %27 = math.exp %26 : vector<8x2xf32>
    %cst_18 = arith.constant dense<0.000000e+00> : vector<8xf32>
    %28 = vector.multi_reduction <add>, %27, %cst_18 [1] : vector<8x2xf32> to vector<8xf32>
    %29 = vector.shape_cast %28 : vector<8xf32> to vector<8x1xf32>
    %30 = tpu.reciprocal %29 {approx = true} : vector<8x1xf32> -> vector<8x1xf32>
    %31 = vector.broadcast %30 : vector<8x1xf32> to vector<8x2xf32>
    %32 = arith.mulf %27, %31 : vector<8x2xf32>
    %c0_19 = arith.constant 0 : index
    %c0_20 = arith.constant 0 : index
    %33 = vector.load %arg8[%c0_19, %c0_20] : memref<8x2xf32, #tpu.memory_space<vmem>>, vector<8x2xf32>
    tpu.vector_store %arg8[%c0_19, %c0_20], %32 {strides = array<i32>} : memref<8x2xf32, #tpu.memory_space<vmem>>, vector<8x2xf32>,
    return
  }
  func.func @transform_0(%arg0: i32) -> (i32, i32) {
    %c0_i32 = arith.constant 0 : i32
    %c0_i32_0 = arith.constant 0 : i32
    return %arg0, %c0_i32 : i32, i32
  }
  func.func @transform_1(%arg0: i32) -> (i32, i32) {
    %c0_i32 = arith.constant 0 : i32
    %c0_i32_0 = arith.constant 0 : i32
    %c0_i32_1 = arith.constant 0 : i32
    return %c0_i32, %c0_i32_0 : i32, i32
  }
  func.func @transform_2(%arg0: i32) -> (i32, i32) {
    %c0_i32 = arith.constant 0 : i32
    %c0_i32_0 = arith.constant 0 : i32
    %c0_i32_1 = arith.constant 0 : i32
    return %c0_i32, %c0_i32_0 : i32, i32
  }
  func.func @transform_3(%arg0: i32) -> (i32, i32) {
    %c0_i32 = arith.constant 0 : i32
    %c0_i32_0 = arith.constant 0 : i32
    %c0_i32_1 = arith.constant 0 : i32
    return %c0_i32, %c0_i32_0 : i32, i32
  }
  func.func @transform_4(%arg0: i32) -> (i32, i32) {
    %c0_i32 = arith.constant 0 : i32
    %c0_i32_0 = arith.constant 0 : i32
    %c0_i32_1 = arith.constant 0 : i32
    return %c0_i32, %c0_i32_0 : i32, i32
  }
  func.func @transform_5(%arg0: i32) -> (i32, i32) {
    %c0_i32 = arith.constant 0 : i32
    %c0_i32_0 = arith.constant 0 : i32
    %c0_i32_1 = arith.constant 0 : i32
    return %c0_i32, %c0_i32_0 : i32, i32
  }
  func.func @transform_6(%arg0: i32) -> (i32, i32) {
    %c0_i32 = arith.constant 0 : i32
    %c0_i32_0 = arith.constant 0 : i32
    %c0_i32_1 = arith.constant 0 : i32
    return %c0_i32, %c0_i32_0 : i32, i32
  }
  func.func @transform_7(%arg0: i32) -> (i32, i32) {
    %c0_i32 = arith.constant 0 : i32
    %c0_i32_0 = arith.constant 0 : i32
    return %arg0, %c0_i32 : i32, i32
  }
}

</mosaic_0001>

<llo_original>
// kernel: tpu_custom_call.1
$region0: #{tpu_custom_call.1}
  #allocation0 [shape = 'u32[]', space=smem, size = 0x4, offset = 0x4, fixed_abs, tag = 'smem constant byte address 0x4 - core index']
  #allocation1 [shape = 'u32[144,128]{1,0:T(1,128)}', space=vmem, size = 0x12000, scoped, tag = 'internal scratch']
  %s0 = inlined_call_operand.vmem [shape: f32[8,2048], index: 0, kind: input, shape index: {}]
  %s1 = inlined_call_operand.hbm [shape: bf16[2048,256], index: 1, kind: input, shape index: {}]
  %s2 = inlined_call_operand.vmem [shape: f32[1,256], index: 2, kind: input, shape index: {}]
  %s3 = inlined_call_operand.vmem [shape: bf16[256,64], index: 3, kind: input, shape index: {}]
  %s4 = inlined_call_operand.vmem [shape: f32[1,64], index: 4, kind: input, shape index: {}]
  %s5 = inlined_call_operand.vmem [shape: bf16[64,2], index: 5, kind: input, shape index: {}]
  %s6 = inlined_call_operand.vmem [shape: f32[1,2], index: 6, kind: input, shape index: {}]
  %s7 = inlined_call_operand.vmem [shape: f32[8,2], index: 7, kind: output, shape index: {}]
  %s8 = sld [smem:[#allocation0]]
  $region42: #{tpu_custom_call.1} parent=0
    _
  %s10 = ssub.s32 1, %s8
  %s11 = scalar_select 0, %s10, %s8
  $region1: #{tpu_custom_call.1} parent=0
    #allocation2 [shape = 'u8[1048576]{0}', space=vmem, size = 0x100000, scoped, tag = 'input window, operand 1, single buffered']
    #allocation3 [shape = 's32[1]{0}', space=sflag, size = 0x4, scoped, tag = 'scoped memory for tpu_custom_call.1']
    %12 = vsyncpa [#allocation3], 0
    // Predicated region
    $region2: #{tpu_custom_call.1} parent=1 // pred_check
      _
    $region3: #{tpu_custom_call.1} parent=1 // pred_check_branch
      %14 = sbr.rel (0) target = $region5
    $region4: #{tpu_custom_call.1} parent=1 // pred_region
      _
    $region5: #{tpu_custom_call.1} parent=1 // pred_fallthru
      _
    // Predicated region
    $region6: #{tpu_custom_call.1} parent=1 // pred_check
      _
    $region7: #{tpu_custom_call.1} parent=1 // pred_check_branch
      %16 = sbr.rel (0) target = $region9
    $region8: #{tpu_custom_call.1} parent=1 // pred_region
      %s18 = ssub.s32 32768, 32768
      %19 = vsyncadd [#allocation3], %s18
      %s20 = sshll.u32 [#allocation2], 4
      %s21 = int_to_ptr.vmem [resolvable:$true] %s20
      %26 = dma.hbm_to_vmem [thread:$0]  %s1, 32768, %s21, [#allocation3], 128, 128, 8
    $region9: #{tpu_custom_call.1} parent=1 // pred_fallthru
      _
    // Predicated region
    $region10: #{tpu_custom_call.1} parent=1 // pred_check
      _
    $region11: #{tpu_custom_call.1} parent=1 // pred_check_branch
      %28 = sbr.rel (0) target = $region13
    $region12: #{tpu_custom_call.1} parent=1 // pred_region
      _
    $region13: #{tpu_custom_call.1} parent=1 // pred_fallthru
      _
    // Predicated region
    $region14: #{tpu_custom_call.1} parent=1 // pred_check
      _
    $region15: #{tpu_custom_call.1} parent=1 // pred_check_branch
      %30 = sbr.rel (0) target = $region17
    $region16: #{tpu_custom_call.1} parent=1 // pred_region
      _
    $region17: #{tpu_custom_call.1} parent=1 // pred_fallthru
      _
    // Predicated region
    $region18: #{tpu_custom_call.1} parent=1 // pred_check
      _
    $region19: #{tpu_custom_call.1} parent=1 // pred_check_branch
      %32 = sbr.rel (0) target = $region21
    $region20: #{tpu_custom_call.1} parent=1 // pred_region
      _
    $region21: #{tpu_custom_call.1} parent=1 // pred_fallthru
      _
    // Predicated region
    $region22: #{tpu_custom_call.1} parent=1 // pred_check
      _
    $region23: #{tpu_custom_call.1} parent=1 // pred_check_branch
      %34 = sbr.rel (0) target = $region25
    $region24: #{tpu_custom_call.1} parent=1 // pred_region
      _
    $region25: #{tpu_custom_call.1} parent=1 // pred_fallthru
      _
    // Predicated region
    $region26: #{tpu_custom_call.1} parent=1 // pred_check
      _
    $region27: #{tpu_custom_call.1} parent=1 // pred_check_branch
      %36 = sbr.rel (0) target = $region29
    $region28: #{tpu_custom_call.1} parent=1 // pred_region
      _
    $region29: #{tpu_custom_call.1} parent=1 // pred_fallthru
      _
    // Predicated region
    $region30: #{tpu_custom_call.1} parent=1 // pred_check
      _
    $region31: #{tpu_custom_call.1} parent=1 // pred_check_branch
      %38 = sbr.rel (0) target = $region33
    $region32: #{tpu_custom_call.1} parent=1 // pred_region
      %39 = dma.done [#allocation3], 32768
    $region33: #{tpu_custom_call.1} parent=1 // pred_fallthru
      _
    %v41 = vld [vmem:[%s0] sm:$0xff]
    %v42 = vld [vmem:[%s0 + $0x8] sm:$0xff]
    %v43 = vld [vmem:[%s0 + $0x10] sm:$0xff]
    %v44 = vld [vmem:[%s0 + $0x18] sm:$0xff]
    %v45 = vld [vmem:[%s0 + $0x20] sm:$0xff]
    %v46 = vld [vmem:[%s0 + $0x28] sm:$0xff]
    %v47 = vld [vmem:[%s0 + $0x30] sm:$0xff]
    %v48 = vld [vmem:[%s0 + $0x38] sm:$0xff]
    %v49 = vld [vmem:[%s0 + $0x40] sm:$0xff]
    %v50 = vld [vmem:[%s0 + $0x48] sm:$0xff]
    %v51 = vld [vmem:[%s0 + $0x50] sm:$0xff]
    %v52 = vld [vmem:[%s0 + $0x58] sm:$0xff]
    %v53 = vld [vmem:[%s0 + $0x60] sm:$0xff]
    %v54 = vld [vmem:[%s0 + $0x68] sm:$0xff]
    %v55 = vld [vmem:[%s0 + $0x70] sm:$0xff]
    %v56 = vld [vmem:[%s0 + $0x78] sm:$0xff]
    %v57 = vpack.c.bf16 %v41, %v41
    %v58 = vpack.c.bf16 %v42, %v42
    %v59 = vpack.c.bf16 %v43, %v43
    %v60 = vpack.c.bf16 %v44, %v44
    %v61 = vpack.c.bf16 %v45, %v45
    %v62 = vpack.c.bf16 %v46, %v46
    %v63 = vpack.c.bf16 %v47, %v47
    %v64 = vpack.c.bf16 %v48, %v48
    %v65 = vpack.c.bf16 %v49, %v49
    %v66 = vpack.c.bf16 %v50, %v50
    %v67 = vpack.c.bf16 %v51, %v51
    %v68 = vpack.c.bf16 %v52, %v52
    %v69 = vpack.c.bf16 %v53, %v53
    %v70 = vpack.c.bf16 %v54, %v54
    %v71 = vpack.c.bf16 %v55, %v55
    %v72 = vpack.c.bf16 %v56, %v56
    %v73 = vld [vmem:[#allocation2] sm:$0xff]
    %v74 = vld [vmem:[#allocation2 + $0x8] sm:$0xff]
    %v75 = vld [vmem:[#allocation2 + $0x10] sm:$0xff]
    %v76 = vld [vmem:[#allocation2 + $0x18] sm:$0xff]
    %v77 = vld [vmem:[#allocation2 + $0x20] sm:$0xff]
    %v78 = vld [vmem:[#allocation2 + $0x28] sm:$0xff]
    %v79 = vld [vmem:[#allocation2 + $0x30] sm:$0xff]
    %v80 = vld [vmem:[#allocation2 + $0x38] sm:$0xff]
    %v81 = vld [vmem:[#allocation2 + $0x40] sm:$0xff]
    %v82 = vld [vmem:[#allocation2 + $0x48] sm:$0xff]
    %v83 = vld [vmem:[#allocation2 + $0x50] sm:$0xff]
    %v84 = vld [vmem:[#allocation2 + $0x58] sm:$0xff]
    %v85 = vld [vmem:[#allocation2 + $0x60] sm:$0xff]
    %v86 = vld [vmem:[#allocation2 + $0x68] sm:$0xff]
    %v87 = vld [vmem:[#allocation2 + $0x70] sm:$0xff]
    %v88 = vld [vmem:[#allocation2 + $0x78] sm:$0xff]
    %v89 = vld [vmem:[#allocation2 + $0x80] sm:$0xff]
    %v90 = vld [vmem:[#allocation2 + $0x88] sm:$0xff]
    %v91 = vld [vmem:[#allocation2 + $0x90] sm:$0xff]
    %v92 = vld [vmem:[#allocation2 + $0x98] sm:$0xff]
    %v93 = vld [vmem:[#allocation2 + $0xa0] sm:$0xff]
    %v94 = vld [vmem:[#allocation2 + $0xa8] sm:$0xff]
    %v95 = vld [vmem:[#allocation2 + $0xb0] sm:$0xff]
    %v96 = vld [vmem:[#allocation2 + $0xb8] sm:$0xff]
    %v97 = vld [vmem:[#allocation2 + $0xc0] sm:$0xff]
    %v98 = vld [vmem:[#allocation2 + $0xc8] sm:$0xff]
    %v99 = vld [vmem:[#allocation2 + $0xd0] sm:$0xff]
    %v100 = vld [vmem:[#allocation2 + $0xd8] sm:$0xff]
    %v101 = vld [vmem:[#allocation2 + $0xe0] sm:$0xff]
    %v102 = vld [vmem:[#allocation2 + $0xe8] sm:$0xff]
    %v103 = vld [vmem:[#allocation2 + $0xf0] sm:$0xff]
    %v104 = vld [vmem:[#allocation2 + $0xf8] sm:$0xff]
    %v105 = vld [vmem:[#allocation2 + $0x100] sm:$0xff]
    %v106 = vld [vmem:[#allocation2 + $0x108] sm:$0xff]
    %v107 = vld [vmem:[#allocation2 + $0x110] sm:$0xff]
    %v108 = vld [vmem:[#allocation2 + $0x118] sm:$0xff]
    %v109 = vld [vmem:[#allocation2 + $0x120] sm:$0xff]
    %v110 = vld [vmem:[#allocation2 + $0x128] sm:$0xff]
    %v111 = vld [vmem:[#allocation2 + $0x130] sm:$0xff]
    %v112 = vld [vmem:[#allocation2 + $0x138] sm:$0xff]
    %v113 = vld [vmem:[#allocation2 + $0x140] sm:$0xff]
    %v114 = vld [vmem:[#allocation2 + $0x148] sm:$0xff]
    %v115 = vld [vmem:[#allocation2 + $0x150] sm:$0xff]
    %v116 = vld [vmem:[#allocation2 + $0x158] sm:$0xff]
    %v117 = vld [vmem:[#allocation2 + $0x160] sm:$0xff]
    %v118 = vld [vmem:[#allocation2 + $0x168] sm:$0xff]
    %v119 = vld [vmem:[#allocation2 + $0x170] sm:$0xff]
    %v120 = vld [vmem:[#allocation2 + $0x178] sm:$0xff]
    %v121 = vld [vmem:[#allocation2 + $0x180] sm:$0xff]
    %v122 = vld [vmem:[#allocation2 + $0x188] sm:$0xff]
    %v123 = vld [vmem:[#allocation2 + $0x190] sm:$0xff]
    %v124 = vld [vmem:[#allocation2 + $0x198] sm:$0xff]
    %v125 = vld [vmem:[#allocation2 + $0x1a0] sm:$0xff]
    %v126 = vld [vmem:[#allocation2 + $0x1a8] sm:$0xff]
    %v127 = vld [vmem:[#allocation2 + $0x1b0] sm:$0xff]
    %v128 = vld [vmem:[#allocation2 + $0x1b8] sm:$0xff]
    %v129 = vld [vmem:[#allocation2 + $0x1c0] sm:$0xff]
    %v130 = vld [vmem:[#allocation2 + $0x1c8] sm:$0xff]
    %v131 = vld [vmem:[#allocation2 + $0x1d0] sm:$0xff]
    %v132 = vld [vmem:[#allocation2 + $0x1d8] sm:$0xff]
    %v133 = vld [vmem:[#allocation2 + $0x1e0] sm:$0xff]
    %v134 = vld [vmem:[#allocation2 + $0x1e8] sm:$0xff]
    %v135 = vld [vmem:[#allocation2 + $0x1f0] sm:$0xff]
    %v136 = vld [vmem:[#allocation2 + $0x1f8] sm:$0xff]
    %v137 = vld [vmem:[#allocation2 + $0x200] sm:$0xff]
    %v138 = vld [vmem:[#allocation2 + $0x208] sm:$0xff]
    %v139 = vld [vmem:[#allocation2 + $0x210] sm:$0xff]
    %v140 = vld [vmem:[#allocation2 + $0x218] sm:$0xff]
    %v141 = vld [vmem:[#allocation2 + $0x220] sm:$0xff]
    %v142 = vld [vmem:[#allocation2 + $0x228] sm:$0xff]
    %v143 = vld [vmem:[#allocation2 + $0x230] sm:$0xff]
    %v144 = vld [vmem:[#allocation2 + $0x238] sm:$0xff]
    %v145 = vld [vmem:[#allocation2 + $0x240] sm:$0xff]
    %v146 = vld [vmem:[#allocation2 + $0x248] sm:$0xff]
    %v147 = vld [vmem:[#allocation2 + $0x250] sm:$0xff]
    %v148 = vld [vmem:[#allocation2 + $0x258] sm:$0xff]
    %v149 = vld [vmem:[#allocation2 + $0x260] sm:$0xff]
    %v150 = vld [vmem:[#allocation2 + $0x268] sm:$0xff]
    %v151 = vld [vmem:[#allocation2 + $0x270] sm:$0xff]
    %v152 = vld [vmem:[#allocation2 + $0x278] sm:$0xff]
    %v153 = vld [vmem:[#allocation2 + $0x280] sm:$0xff]
    %v154 = vld [vmem:[#allocation2 + $0x288] sm:$0xff]
    %v155 = vld [vmem:[#allocation2 + $0x290] sm:$0xff]
    %v156 = vld [vmem:[#allocation2 + $0x298] sm:$0xff]
    %v157 = vld [vmem:[#allocation2 + $0x2a0] sm:$0xff]
    %v158 = vld [vmem:[#allocation2 + $0x2a8] sm:$0xff]
    %v159 = vld [vmem:[#allocation2 + $0x2b0] sm:$0xff]
    %v160 = vld [vmem:[#allocation2 + $0x2b8] sm:$0xff]
    %v161 = vld [vmem:[#allocation2 + $0x2c0] sm:$0xff]
    %v162 = vld [vmem:[#allocation2 + $0x2c8] sm:$0xff]
    %v163 = vld [vmem:[#allocation2 + $0x2d0] sm:$0xff]
    %v164 = vld [vmem:[#allocation2 + $0x2d8] sm:$0xff]
    %v165 = vld [vmem:[#allocation2 + $0x2e0] sm:$0xff]
    %v166 = vld [vmem:[#allocation2 + $0x2e8] sm:$0xff]
    %v167 = vld [vmem:[#allocation2 + $0x2f0] sm:$0xff]
    %v168 = vld [vmem:[#allocation2 + $0x2f8] sm:$0xff]
    %v169 = vld [vmem:[#allocation2 + $0x300] sm:$0xff]
    %v170 = vld [vmem:[#allocation2 + $0x308] sm:$0xff]
    %v171 = vld [vmem:[#allocation2 + $0x310] sm:$0xff]
    %v172 = vld [vmem:[#allocation2 + $0x318] sm:$0xff]
    %v173 = vld [vmem:[#allocation2 + $0x320] sm:$0xff]
    %v174 = vld [vmem:[#allocation2 + $0x328] sm:$0xff]
    %v175 = vld [vmem:[#allocation2 + $0x330] sm:$0xff]
    %v176 = vld [vmem:[#allocation2 + $0x338] sm:$0xff]
    %v177 = vld [vmem:[#allocation2 + $0x340] sm:$0xff]
    %v178 = vld [vmem:[#allocation2 + $0x348] sm:$0xff]
    %v179 = vld [vmem:[#allocation2 + $0x350] sm:$0xff]
    %v180 = vld [vmem:[#allocation2 + $0x358] sm:$0xff]
    %v181 = vld [vmem:[#allocation2 + $0x360] sm:$0xff]
    %v182 = vld [vmem:[#allocation2 + $0x368] sm:$0xff]
    %v183 = vld [vmem:[#allocation2 + $0x370] sm:$0xff]
    %v184 = vld [vmem:[#allocation2 + $0x378] sm:$0xff]
    %v185 = vld [vmem:[#allocation2 + $0x380] sm:$0xff]
    %v186 = vld [vmem:[#allocation2 + $0x388] sm:$0xff]
    %v187 = vld [vmem:[#allocation2 + $0x390] sm:$0xff]
    %v188 = vld [vmem:[#allocation2 + $0x398] sm:$0xff]
    %v189 = vld [vmem:[#allocation2 + $0x3a0] sm:$0xff]
    %v190 = vld [vmem:[#allocation2 + $0x3a8] sm:$0xff]
    %v191 = vld [vmem:[#allocation2 + $0x3b0] sm:$0xff]
    %v192 = vld [vmem:[#allocation2 + $0x3b8] sm:$0xff]
    %v193 = vld [vmem:[#allocation2 + $0x3c0] sm:$0xff]
    %v194 = vld [vmem:[#allocation2 + $0x3c8] sm:$0xff]
    %v195 = vld [vmem:[#allocation2 + $0x3d0] sm:$0xff]
    %v196 = vld [vmem:[#allocation2 + $0x3d8] sm:$0xff]
    %v197 = vld [vmem:[#allocation2 + $0x3e0] sm:$0xff]
    %v198 = vld [vmem:[#allocation2 + $0x3e8] sm:$0xff]
    %v199 = vld [vmem:[#allocation2 + $0x3f0] sm:$0xff]
    %v200 = vld [vmem:[#allocation2 + $0x3f8] sm:$0xff]
    %v201 = vld [vmem:[#allocation2 + $0x400] sm:$0xff]
    %v202 = vld [vmem:[#allocation2 + $0x408] sm:$0xff]
    %v203 = vld [vmem:[#allocation2 + $0x410] sm:$0xff]
    %v204 = vld [vmem:[#allocation2 + $0x418] sm:$0xff]
    %v205 = vld [vmem:[#allocation2 + $0x420] sm:$0xff]
    %v206 = vld [vmem:[#allocation2 + $0x428] sm:$0xff]
    %v207 = vld [vmem:[#allocation2 + $0x430] sm:$0xff]
    %v208 = vld [vmem:[#allocation2 + $0x438] sm:$0xff]
    %v209 = vld [vmem:[#allocation2 + $0x440] sm:$0xff]
    %v210 = vld [vmem:[#allocation2 + $0x448] sm:$0xff]
    %v211 = vld [vmem:[#allocation2 + $0x450] sm:$0xff]
    %v212 = vld [vmem:[#allocation2 + $0x458] sm:$0xff]
    %v213 = vld [vmem:[#allocation2 + $0x460] sm:$0xff]
    %v214 = vld [vmem:[#allocation2 + $0x468] sm:$0xff]
    %v215 = vld [vmem:[#allocation2 + $0x470] sm:$0xff]
    %v216 = vld [vmem:[#allocation2 + $0x478] sm:$0xff]
    %v217 = vld [vmem:[#allocation2 + $0x480] sm:$0xff]
    %v218 = vld [vmem:[#allocation2 + $0x488] sm:$0xff]
    %v219 = vld [vmem:[#allocation2 + $0x490] sm:$0xff]
    %v220 = vld [vmem:[#allocation2 + $0x498] sm:$0xff]
    %v221 = vld [vmem:[#allocation2 + $0x4a0] sm:$0xff]
    %v222 = vld [vmem:[#allocation2 + $0x4a8] sm:$0xff]
    %v223 = vld [vmem:[#allocation2 + $0x4b0] sm:$0xff]
    %v224 = vld [vmem:[#allocation2 + $0x4b8] sm:$0xff]
    %v225 = vld [vmem:[#allocation2 + $0x4c0] sm:$0xff]
    %v226 = vld [vmem:[#allocation2 + $0x4c8] sm:$0xff]
    %v227 = vld [vmem:[#allocation2 + $0x4d0] sm:$0xff]
    %v228 = vld [vmem:[#allocation2 + $0x4d8] sm:$0xff]
    %v229 = vld [vmem:[#allocation2 + $0x4e0] sm:$0xff]
    %v230 = vld [vmem:[#allocation2 + $0x4e8] sm:$0xff]
    %v231 = vld [vmem:[#allocation2 + $0x4f0] sm:$0xff]
    %v232 = vld [vmem:[#allocation2 + $0x4f8] sm:$0xff]
    %v233 = vld [vmem:[#allocation2 + $0x500] sm:$0xff]
    %v234 = vld [vmem:[#allocation2 + $0x508] sm:$0xff]
    %v235 = vld [vmem:[#allocation2 + $0x510] sm:$0xff]
    %v236 = vld [vmem:[#allocation2 + $0x518] sm:$0xff]
    %v237 = vld [vmem:[#allocation2 + $0x520] sm:$0xff]
    %v238 = vld [vmem:[#allocation2 + $0x528] sm:$0xff]
    %v239 = vld [vmem:[#allocation2 + $0x530] sm:$0xff]
    %v240 = vld [vmem:[#allocation2 + $0x538] sm:$0xff]
    %v241 = vld [vmem:[#allocation2 + $0x540] sm:$0xff]
    %v242 = vld [vmem:[#allocation2 + $0x548] sm:$0xff]
    %v243 = vld [vmem:[#allocation2 + $0x550] sm:$0xff]
    %v244 = vld [vmem:[#allocation2 + $0x558] sm:$0xff]
    %v245 = vld [vmem:[#allocation2 + $0x560] sm:$0xff]
    %v246 = vld [vmem:[#allocation2 + $0x568] sm:$0xff]
    %v247 = vld [vmem:[#allocation2 + $0x570] sm:$0xff]
    %v248 = vld [vmem:[#allocation2 + $0x578] sm:$0xff]
    %v249 = vld [vmem:[#allocation2 + $0x580] sm:$0xff]
    %v250 = vld [vmem:[#allocation2 + $0x588] sm:$0xff]
    %v251 = vld [vmem:[#allocation2 + $0x590] sm:$0xff]
    %v252 = vld [vmem:[#allocation2 + $0x598] sm:$0xff]
    %v253 = vld [vmem:[#allocation2 + $0x5a0] sm:$0xff]
    %v254 = vld [vmem:[#allocation2 + $0x5a8] sm:$0xff]
    %v255 = vld [vmem:[#allocation2 + $0x5b0] sm:$0xff]
    %v256 = vld [vmem:[#allocation2 + $0x5b8] sm:$0xff]
    %v257 = vld [vmem:[#allocation2 + $0x5c0] sm:$0xff]
    %v258 = vld [vmem:[#allocation2 + $0x5c8] sm:$0xff]
    %v259 = vld [vmem:[#allocation2 + $0x5d0] sm:$0xff]
    %v260 = vld [vmem:[#allocation2 + $0x5d8] sm:$0xff]
    %v261 = vld [vmem:[#allocation2 + $0x5e0] sm:$0xff]
    %v262 = vld [vmem:[#allocation2 + $0x5e8] sm:$0xff]
    %v263 = vld [vmem:[#allocation2 + $0x5f0] sm:$0xff]
    %v264 = vld [vmem:[#allocation2 + $0x5f8] sm:$0xff]
    %v265 = vld [vmem:[#allocation2 + $0x600] sm:$0xff]
    %v266 = vld [vmem:[#allocation2 + $0x608] sm:$0xff]
    %v267 = vld [vmem:[#allocation2 + $0x610] sm:$0xff]
    %v268 = vld [vmem:[#allocation2 + $0x618] sm:$0xff]
    %v269 = vld [vmem:[#allocation2 + $0x620] sm:$0xff]
    %v270 = vld [vmem:[#allocation2 + $0x628] sm:$0xff]
    %v271 = vld [vmem:[#allocation2 + $0x630] sm:$0xff]
    %v272 = vld [vmem:[#allocation2 + $0x638] sm:$0xff]
    %v273 = vld [vmem:[#allocation2 + $0x640] sm:$0xff]
    %v274 = vld [vmem:[#allocation2 + $0x648] sm:$0xff]
    %v275 = vld [vmem:[#allocation2 + $0x650] sm:$0xff]
    %v276 = vld [vmem:[#allocation2 + $0x658] sm:$0xff]
    %v277 = vld [vmem:[#allocation2 + $0x660] sm:$0xff]
    %v278 = vld [vmem:[#allocation2 + $0x668] sm:$0xff]
    %v279 = vld [vmem:[#allocation2 + $0x670] sm:$0xff]
    %v280 = vld [vmem:[#allocation2 + $0x678] sm:$0xff]
    %v281 = vld [vmem:[#allocation2 + $0x680] sm:$0xff]
    %v282 = vld [vmem:[#allocation2 + $0x688] sm:$0xff]
    %v283 = vld [vmem:[#allocation2 + $0x690] sm:$0xff]
    %v284 = vld [vmem:[#allocation2 + $0x698] sm:$0xff]
    %v285 = vld [vmem:[#allocation2 + $0x6a0] sm:$0xff]
    %v286 = vld [vmem:[#allocation2 + $0x6a8] sm:$0xff]
    %v287 = vld [vmem:[#allocation2 + $0x6b0] sm:$0xff]
    %v288 = vld [vmem:[#allocation2 + $0x6b8] sm:$0xff]
    %v289 = vld [vmem:[#allocation2 + $0x6c0] sm:$0xff]
    %v290 = vld [vmem:[#allocation2 + $0x6c8] sm:$0xff]
    %v291 = vld [vmem:[#allocation2 + $0x6d0] sm:$0xff]
    %v292 = vld [vmem:[#allocation2 + $0x6d8] sm:$0xff]
    %v293 = vld [vmem:[#allocation2 + $0x6e0] sm:$0xff]
    %v294 = vld [vmem:[#allocation2 + $0x6e8] sm:$0xff]
    %v295 = vld [vmem:[#allocation2 + $0x6f0] sm:$0xff]
    %v296 = vld [vmem:[#allocation2 + $0x6f8] sm:$0xff]
    %v297 = vld [vmem:[#allocation2 + $0x700] sm:$0xff]
    %v298 = vld [vmem:[#allocation2 + $0x708] sm:$0xff]
    %v299 = vld [vmem:[#allocation2 + $0x710] sm:$0xff]
    %v300 = vld [vmem:[#allocation2 + $0x718] sm:$0xff]
    %v301 = vld [vmem:[#allocation2 + $0x720] sm:$0xff]
    %v302 = vld [vmem:[#allocation2 + $0x728] sm:$0xff]
    %v303 = vld [vmem:[#allocation2 + $0x730] sm:$0xff]
    %v304 = vld [vmem:[#allocation2 + $0x738] sm:$0xff]
    %v305 = vld [vmem:[#allocation2 + $0x740] sm:$0xff]
    %v306 = vld [vmem:[#allocation2 + $0x748] sm:$0xff]
    %v307 = vld [vmem:[#allocation2 + $0x750] sm:$0xff]
    %v308 = vld [vmem:[#allocation2 + $0x758] sm:$0xff]
    %v309 = vld [vmem:[#allocation2 + $0x760] sm:$0xff]
    %v310 = vld [vmem:[#allocation2 + $0x768] sm:$0xff]
    %v311 = vld [vmem:[#allocation2 + $0x770] sm:$0xff]
    %v312 = vld [vmem:[#allocation2 + $0x778] sm:$0xff]
    %v313 = vld [vmem:[#allocation2 + $0x780] sm:$0xff]
    %v314 = vld [vmem:[#allocation2 + $0x788] sm:$0xff]
    %v315 = vld [vmem:[#allocation2 + $0x790] sm:$0xff]
    %v316 = vld [vmem:[#allocation2 + $0x798] sm:$0xff]
    %v317 = vld [vmem:[#allocation2 + $0x7a0] sm:$0xff]
    %v318 = vld [vmem:[#allocation2 + $0x7a8] sm:$0xff]
    %v319 = vld [vmem:[#allocation2 + $0x7b0] sm:$0xff]
    %v320 = vld [vmem:[#allocation2 + $0x7b8] sm:$0xff]
    %v321 = vld [vmem:[#allocation2 + $0x7c0] sm:$0xff]
    %v322 = vld [vmem:[#allocation2 + $0x7c8] sm:$0xff]
    %v323 = vld [vmem:[#allocation2 + $0x7d0] sm:$0xff]
    %v324 = vld [vmem:[#allocation2 + $0x7d8] sm:$0xff]
    %v325 = vld [vmem:[#allocation2 + $0x7e0] sm:$0xff]
    %v326 = vld [vmem:[#allocation2 + $0x7e8] sm:$0xff]
    %v327 = vld [vmem:[#allocation2 + $0x7f0] sm:$0xff]
    %v328 = vld [vmem:[#allocation2 + $0x7f8] sm:$0xff]
    %v329 = vld [vmem:[%s2] sm:$0x3]
    %v331 = vlaneseq
    %v332 = vshrl.u32 %v331, 7
    %v333 = vsub.s32 0, %v332
    %v334 = vrot.slane %v329, %v333
    %v335 = vlaneseq
    %v336 = vshrl.u32 %v335, 7
    %v337 = vsub.s32 1, %v336
    %v338 = vrot.slane %v329, %v337
    %v597 = vunpack.c.l.b16 %v73
    %v598 = vunpack.c.h.b16 %v73
    %v599 = vunpack.c.l.b16 %v74
    %v600 = vunpack.c.h.b16 %v74
    %v601 = vunpack.c.l.b16 %v75
    %v602 = vunpack.c.h.b16 %v75
    %v603 = vunpack.c.l.b16 %v76
    %v604 = vunpack.c.h.b16 %v76
    %v605 = vunpack.c.l.b16 %v77
    %v606 = vunpack.c.h.b16 %v77
    %v607 = vunpack.c.l.b16 %v78
    %v608 = vunpack.c.h.b16 %v78
    %v609 = vunpack.c.l.b16 %v79
    %v610 = vunpack.c.h.b16 %v79
    %v611 = vunpack.c.l.b16 %v80
    %v612 = vunpack.c.h.b16 %v80
    %v613 = vunpack.c.l.b16 %v81
    %v614 = vunpack.c.h.b16 %v81
    %v615 = vunpack.c.l.b16 %v82
    %v616 = vunpack.c.h.b16 %v82
    %v617 = vunpack.c.l.b16 %v83
    %v618 = vunpack.c.h.b16 %v83
    %v619 = vunpack.c.l.b16 %v84
    %v620 = vunpack.c.h.b16 %v84
    %v621 = vunpack.c.l.b16 %v85
    %v622 = vunpack.c.h.b16 %v85
    %v623 = vunpack.c.l.b16 %v86
    %v624 = vunpack.c.h.b16 %v86
    %v625 = vunpack.c.l.b16 %v87
    %v626 = vunpack.c.h.b16 %v87
    %v627 = vunpack.c.l.b16 %v88
    %v628 = vunpack.c.h.b16 %v88
    %v629 = vunpack.c.l.b16 %v89
    %v630 = vunpack.c.h.b16 %v89
    %v631 = vunpack.c.l.b16 %v90
    %v632 = vunpack.c.h.b16 %v90
    %v633 = vunpack.c.l.b16 %v91
    %v634 = vunpack.c.h.b16 %v91
    %v635 = vunpack.c.l.b16 %v92
    %v636 = vunpack.c.h.b16 %v92
    %v637 = vunpack.c.l.b16 %v93
    %v638 = vunpack.c.h.b16 %v93
    %v639 = vunpack.c.l.b16 %v94
    %v640 = vunpack.c.h.b16 %v94
    %v641 = vunpack.c.l.b16 %v95
    %v642 = vunpack.c.h.b16 %v95
    %v643 = vunpack.c.l.b16 %v96
    %v644 = vunpack.c.h.b16 %v96
    %v645 = vunpack.c.l.b16 %v97
    %v646 = vunpack.c.h.b16 %v97
    %v647 = vunpack.c.l.b16 %v98
    %v648 = vunpack.c.h.b16 %v98
    %v649 = vunpack.c.l.b16 %v99
    %v650 = vunpack.c.h.b16 %v99
    %v651 = vunpack.c.l.b16 %v100
    %v652 = vunpack.c.h.b16 %v100
    %v653 = vunpack.c.l.b16 %v101
    %v654 = vunpack.c.h.b16 %v101
    %v655 = vunpack.c.l.b16 %v102
    %v656 = vunpack.c.h.b16 %v102
    %v657 = vunpack.c.l.b16 %v103
    %v658 = vunpack.c.h.b16 %v103
    %v659 = vunpack.c.l.b16 %v104
    %v660 = vunpack.c.h.b16 %v104
    %v661 = vunpack.c.l.b16 %v105
    %v662 = vunpack.c.h.b16 %v105
    %v663 = vunpack.c.l.b16 %v106
    %v664 = vunpack.c.h.b16 %v106
    %v665 = vunpack.c.l.b16 %v107
    %v666 = vunpack.c.h.b16 %v107
    %v667 = vunpack.c.l.b16 %v108
    %v668 = vunpack.c.h.b16 %v108
    %v669 = vunpack.c.l.b16 %v109
    %v670 = vunpack.c.h.b16 %v109
    %v671 = vunpack.c.l.b16 %v110
    %v672 = vunpack.c.h.b16 %v110
    %v673 = vunpack.c.l.b16 %v111
    %v674 = vunpack.c.h.b16 %v111
    %v675 = vunpack.c.l.b16 %v112
    %v676 = vunpack.c.h.b16 %v112
    %v677 = vunpack.c.l.b16 %v113
    %v678 = vunpack.c.h.b16 %v113
    %v679 = vunpack.c.l.b16 %v114
    %v680 = vunpack.c.h.b16 %v114
    %v681 = vunpack.c.l.b16 %v115
    %v682 = vunpack.c.h.b16 %v115
    %v683 = vunpack.c.l.b16 %v116
    %v684 = vunpack.c.h.b16 %v116
    %v685 = vunpack.c.l.b16 %v117
    %v686 = vunpack.c.h.b16 %v117
    %v687 = vunpack.c.l.b16 %v118
    %v688 = vunpack.c.h.b16 %v118
    %v689 = vunpack.c.l.b16 %v119
    %v690 = vunpack.c.h.b16 %v119
    %v691 = vunpack.c.l.b16 %v120
    %v692 = vunpack.c.h.b16 %v120
    %v693 = vunpack.c.l.b16 %v121
    %v694 = vunpack.c.h.b16 %v121
    %v695 = vunpack.c.l.b16 %v122
    %v696 = vunpack.c.h.b16 %v122
    %v697 = vunpack.c.l.b16 %v123
    %v698 = vunpack.c.h.b16 %v123
    %v699 = vunpack.c.l.b16 %v124
    %v700 = vunpack.c.h.b16 %v124
    %v701 = vunpack.c.l.b16 %v125
    %v702 = vunpack.c.h.b16 %v125
    %v703 = vunpack.c.l.b16 %v126
    %v704 = vunpack.c.h.b16 %v126
    %v705 = vunpack.c.l.b16 %v127
    %v706 = vunpack.c.h.b16 %v127
    %v707 = vunpack.c.l.b16 %v128
    %v708 = vunpack.c.h.b16 %v128
    %v709 = vunpack.c.l.b16 %v129
    %v710 = vunpack.c.h.b16 %v129
    %v711 = vunpack.c.l.b16 %v130
    %v712 = vunpack.c.h.b16 %v130
    %v713 = vunpack.c.l.b16 %v131
    %v714 = vunpack.c.h.b16 %v131
    %v715 = vunpack.c.l.b16 %v132
    %v716 = vunpack.c.h.b16 %v132
    %v717 = vunpack.c.l.b16 %v133
    %v718 = vunpack.c.h.b16 %v133
    %v719 = vunpack.c.l.b16 %v134
    %v720 = vunpack.c.h.b16 %v134
    %v721 = vunpack.c.l.b16 %v135
    %v722 = vunpack.c.h.b16 %v135
    %v723 = vunpack.c.l.b16 %v136
    %v724 = vunpack.c.h.b16 %v136
    %v725 = vunpack.c.l.b16 %v137
    %v726 = vunpack.c.h.b16 %v137
    %v727 = vunpack.c.l.b16 %v138
    %v728 = vunpack.c.h.b16 %v138
    %v729 = vunpack.c.l.b16 %v139
    %v730 = vunpack.c.h.b16 %v139
    %v731 = vunpack.c.l.b16 %v140
    %v732 = vunpack.c.h.b16 %v140
    %v733 = vunpack.c.l.b16 %v141
    %v734 = vunpack.c.h.b16 %v141
    %v735 = vunpack.c.l.b16 %v142
    %v736 = vunpack.c.h.b16 %v142
    %v737 = vunpack.c.l.b16 %v143
    %v738 = vunpack.c.h.b16 %v143
    %v739 = vunpack.c.l.b16 %v144
    %v740 = vunpack.c.h.b16 %v144
    %v741 = vunpack.c.l.b16 %v145
    %v742 = vunpack.c.h.b16 %v145
    %v743 = vunpack.c.l.b16 %v146
    %v744 = vunpack.c.h.b16 %v146
    %v745 = vunpack.c.l.b16 %v147
    %v746 = vunpack.c.h.b16 %v147
    %v747 = vunpack.c.l.b16 %v148
    %v748 = vunpack.c.h.b16 %v148
    %v749 = vunpack.c.l.b16 %v149
    %v750 = vunpack.c.h.b16 %v149
    %v751 = vunpack.c.l.b16 %v150
    %v752 = vunpack.c.h.b16 %v150
    %v753 = vunpack.c.l.b16 %v151
    %v754 = vunpack.c.h.b16 %v151
    %v755 = vunpack.c.l.b16 %v152
    %v756 = vunpack.c.h.b16 %v152
    %v757 = vunpack.c.l.b16 %v153
    %v758 = vunpack.c.h.b16 %v153
    %v759 = vunpack.c.l.b16 %v154
    %v760 = vunpack.c.h.b16 %v154
    %v761 = vunpack.c.l.b16 %v155
    %v762 = vunpack.c.h.b16 %v155
    %v763 = vunpack.c.l.b16 %v156
    %v764 = vunpack.c.h.b16 %v156
    %v765 = vunpack.c.l.b16 %v157
    %v766 = vunpack.c.h.b16 %v157
    %v767 = vunpack.c.l.b16 %v158
    %v768 = vunpack.c.h.b16 %v158
    %v769 = vunpack.c.l.b16 %v159
    %v770 = vunpack.c.h.b16 %v159
    %v771 = vunpack.c.l.b16 %v160
    %v772 = vunpack.c.h.b16 %v160
    %v773 = vunpack.c.l.b16 %v161
    %v774 = vunpack.c.h.b16 %v161
    %v775 = vunpack.c.l.b16 %v162
    %v776 = vunpack.c.h.b16 %v162
    %v777 = vunpack.c.l.b16 %v163
    %v778 = vunpack.c.h.b16 %v163
    %v779 = vunpack.c.l.b16 %v164
    %v780 = vunpack.c.h.b16 %v164
    %v781 = vunpack.c.l.b16 %v165
    %v782 = vunpack.c.h.b16 %v165
    %v783 = vunpack.c.l.b16 %v166
    %v784 = vunpack.c.h.b16 %v166
    %v785 = vunpack.c.l.b16 %v167
    %v786 = vunpack.c.h.b16 %v167
    %v787 = vunpack.c.l.b16 %v168
    %v788 = vunpack.c.h.b16 %v168
    %v789 = vunpack.c.l.b16 %v169
    %v790 = vunpack.c.h.b16 %v169
    %v791 = vunpack.c.l.b16 %v170
    %v792 = vunpack.c.h.b16 %v170
    %v793 = vunpack.c.l.b16 %v171
    %v794 = vunpack.c.h.b16 %v171
    %v795 = vunpack.c.l.b16 %v172
    %v796 = vunpack.c.h.b16 %v172
    %v797 = vunpack.c.l.b16 %v173
    %v798 = vunpack.c.h.b16 %v173
    %v799 = vunpack.c.l.b16 %v174
    %v800 = vunpack.c.h.b16 %v174
    %v801 = vunpack.c.l.b16 %v175
    %v802 = vunpack.c.h.b16 %v175
    %v803 = vunpack.c.l.b16 %v176
    %v804 = vunpack.c.h.b16 %v176
    %v805 = vunpack.c.l.b16 %v177
    %v806 = vunpack.c.h.b16 %v177
    %v807 = vunpack.c.l.b16 %v178
    %v808 = vunpack.c.h.b16 %v178
    %v809 = vunpack.c.l.b16 %v179
    %v810 = vunpack.c.h.b16 %v179
    %v811 = vunpack.c.l.b16 %v180
    %v812 = vunpack.c.h.b16 %v180
    %v813 = vunpack.c.l.b16 %v181
    %v814 = vunpack.c.h.b16 %v181
    %v815 = vunpack.c.l.b16 %v182
    %v816 = vunpack.c.h.b16 %v182
    %v817 = vunpack.c.l.b16 %v183
    %v818 = vunpack.c.h.b16 %v183
    %v819 = vunpack.c.l.b16 %v184
    %v820 = vunpack.c.h.b16 %v184
    %v821 = vunpack.c.l.b16 %v185
    %v822 = vunpack.c.h.b16 %v185
    %v823 = vunpack.c.l.b16 %v186
    %v824 = vunpack.c.h.b16 %v186
    %v825 = vunpack.c.l.b16 %v187
    %v826 = vunpack.c.h.b16 %v187
    %v827 = vunpack.c.l.b16 %v188
    %v828 = vunpack.c.h.b16 %v188
    %v829 = vunpack.c.l.b16 %v189
    %v830 = vunpack.c.h.b16 %v189
    %v831 = vunpack.c.l.b16 %v190
    %v832 = vunpack.c.h.b16 %v190
    %v833 = vunpack.c.l.b16 %v191
    %v834 = vunpack.c.h.b16 %v191
    %v835 = vunpack.c.l.b16 %v192
    %v836 = vunpack.c.h.b16 %v192
    %v837 = vunpack.c.l.b16 %v193
    %v838 = vunpack.c.h.b16 %v193
    %v839 = vunpack.c.l.b16 %v194
    %v840 = vunpack.c.h.b16 %v194
    %v841 = vunpack.c.l.b16 %v195
    %v842 = vunpack.c.h.b16 %v195
    %v843 = vunpack.c.l.b16 %v196
    %v844 = vunpack.c.h.b16 %v196
    %v845 = vunpack.c.l.b16 %v197
    %v846 = vunpack.c.h.b16 %v197
    %v847 = vunpack.c.l.b16 %v198
    %v848 = vunpack.c.h.b16 %v198
    %v849 = vunpack.c.l.b16 %v199
    %v850 = vunpack.c.h.b16 %v199
    %v851 = vunpack.c.l.b16 %v200
    %v852 = vunpack.c.h.b16 %v200
    %v853 = vunpack.c.l.b16 %v201
    %v854 = vunpack.c.h.b16 %v201
    %v855 = vunpack.c.l.b16 %v202
    %v856 = vunpack.c.h.b16 %v202
    %v857 = vunpack.c.l.b16 %v203
    %v858 = vunpack.c.h.b16 %v203
    %v859 = vunpack.c.l.b16 %v204
    %v860 = vunpack.c.h.b16 %v204
    %v861 = vunpack.c.l.b16 %v205
    %v862 = vunpack.c.h.b16 %v205
    %v863 = vunpack.c.l.b16 %v206
    %v864 = vunpack.c.h.b16 %v206
    %v865 = vunpack.c.l.b16 %v207
    %v866 = vunpack.c.h.b16 %v207
    %v867 = vunpack.c.l.b16 %v208
    %v868 = vunpack.c.h.b16 %v208
    %v869 = vunpack.c.l.b16 %v209
    %v870 = vunpack.c.h.b16 %v209
    %v871 = vunpack.c.l.b16 %v210
    %v872 = vunpack.c.h.b16 %v210
    %v873 = vunpack.c.l.b16 %v211
    %v874 = vunpack.c.h.b16 %v211
    %v875 = vunpack.c.l.b16 %v212
    %v876 = vunpack.c.h.b16 %v212
    %v877 = vunpack.c.l.b16 %v213
    %v878 = vunpack.c.h.b16 %v213
    %v879 = vunpack.c.l.b16 %v214
    %v880 = vunpack.c.h.b16 %v214
    %v881 = vunpack.c.l.b16 %v215
    %v882 = vunpack.c.h.b16 %v215
    %v883 = vunpack.c.l.b16 %v216
    %v884 = vunpack.c.h.b16 %v216
    %v885 = vunpack.c.l.b16 %v217
    %v886 = vunpack.c.h.b16 %v217
    %v887 = vunpack.c.l.b16 %v218
    %v888 = vunpack.c.h.b16 %v218
    %v889 = vunpack.c.l.b16 %v219
    %v890 = vunpack.c.h.b16 %v219
    %v891 = vunpack.c.l.b16 %v220
    %v892 = vunpack.c.h.b16 %v220
    %v893 = vunpack.c.l.b16 %v221
    %v894 = vunpack.c.h.b16 %v221
    %v895 = vunpack.c.l.b16 %v222
    %v896 = vunpack.c.h.b16 %v222
    %v897 = vunpack.c.l.b16 %v223
    %v898 = vunpack.c.h.b16 %v223
    %v899 = vunpack.c.l.b16 %v224
    %v900 = vunpack.c.h.b16 %v224
    %v901 = vunpack.c.l.b16 %v225
    %v902 = vunpack.c.h.b16 %v225
    %v903 = vunpack.c.l.b16 %v226
    %v904 = vunpack.c.h.b16 %v226
    %v905 = vunpack.c.l.b16 %v227
    %v906 = vunpack.c.h.b16 %v227
    %v907 = vunpack.c.l.b16 %v228
    %v908 = vunpack.c.h.b16 %v228
    %v909 = vunpack.c.l.b16 %v229
    %v910 = vunpack.c.h.b16 %v229
    %v911 = vunpack.c.l.b16 %v230
    %v912 = vunpack.c.h.b16 %v230
    %v913 = vunpack.c.l.b16 %v231
    %v914 = vunpack.c.h.b16 %v231
    %v915 = vunpack.c.l.b16 %v232
    %v916 = vunpack.c.h.b16 %v232
    %v917 = vunpack.c.l.b16 %v233
    %v918 = vunpack.c.h.b16 %v233
    %v919 = vunpack.c.l.b16 %v234
    %v920 = vunpack.c.h.b16 %v234
    %v921 = vunpack.c.l.b16 %v235
    %v922 = vunpack.c.h.b16 %v235
    %v923 = vunpack.c.l.b16 %v236
    %v924 = vunpack.c.h.b16 %v236
    %v925 = vunpack.c.l.b16 %v237
    %v926 = vunpack.c.h.b16 %v237
    %v927 = vunpack.c.l.b16 %v238
    %v928 = vunpack.c.h.b16 %v238
    %v929 = vunpack.c.l.b16 %v239
    %v930 = vunpack.c.h.b16 %v239
    %v931 = vunpack.c.l.b16 %v240
    %v932 = vunpack.c.h.b16 %v240
    %v933 = vunpack.c.l.b16 %v241
    %v934 = vunpack.c.h.b16 %v241
    %v935 = vunpack.c.l.b16 %v242
    %v936 = vunpack.c.h.b16 %v242
    %v937 = vunpack.c.l.b16 %v243
    %v938 = vunpack.c.h.b16 %v243
    %v939 = vunpack.c.l.b16 %v244
    %v940 = vunpack.c.h.b16 %v244
    %v941 = vunpack.c.l.b16 %v245
    %v942 = vunpack.c.h.b16 %v245
    %v943 = vunpack.c.l.b16 %v246
    %v944 = vunpack.c.h.b16 %v246
    %v945 = vunpack.c.l.b16 %v247
    %v946 = vunpack.c.h.b16 %v247
    %v947 = vunpack.c.l.b16 %v248
    %v948 = vunpack.c.h.b16 %v248
    %v949 = vunpack.c.l.b16 %v249
    %v950 = vunpack.c.h.b16 %v249
    %v951 = vunpack.c.l.b16 %v250
    %v952 = vunpack.c.h.b16 %v250
    %v953 = vunpack.c.l.b16 %v251
    %v954 = vunpack.c.h.b16 %v251
    %v955 = vunpack.c.l.b16 %v252
    %v956 = vunpack.c.h.b16 %v252
    %v957 = vunpack.c.l.b16 %v253
    %v958 = vunpack.c.h.b16 %v253
    %v959 = vunpack.c.l.b16 %v254
    %v960 = vunpack.c.h.b16 %v254
    %v961 = vunpack.c.l.b16 %v255
    %v962 = vunpack.c.h.b16 %v255
    %v963 = vunpack.c.l.b16 %v256
    %v964 = vunpack.c.h.b16 %v256
    %v965 = vunpack.c.l.b16 %v257
    %v966 = vunpack.c.h.b16 %v257
    %v967 = vunpack.c.l.b16 %v258
    %v968 = vunpack.c.h.b16 %v258
    %v969 = vunpack.c.l.b16 %v259
    %v970 = vunpack.c.h.b16 %v259
    %v971 = vunpack.c.l.b16 %v260
    %v972 = vunpack.c.h.b16 %v260
    %v973 = vunpack.c.l.b16 %v261
    %v974 = vunpack.c.h.b16 %v261
    %v975 = vunpack.c.l.b16 %v262
    %v976 = vunpack.c.h.b16 %v262
    %v977 = vunpack.c.l.b16 %v263
    %v978 = vunpack.c.h.b16 %v263
    %v979 = vunpack.c.l.b16 %v264
    %v980 = vunpack.c.h.b16 %v264
    %v981 = vunpack.c.l.b16 %v265
    %v982 = vunpack.c.h.b16 %v265
    %v983 = vunpack.c.l.b16 %v266
    %v984 = vunpack.c.h.b16 %v266
    %v985 = vunpack.c.l.b16 %v267
    %v986 = vunpack.c.h.b16 %v267
    %v987 = vunpack.c.l.b16 %v268
    %v988 = vunpack.c.h.b16 %v268
    %v989 = vunpack.c.l.b16 %v269
    %v990 = vunpack.c.h.b16 %v269
    %v991 = vunpack.c.l.b16 %v270
    %v992 = vunpack.c.h.b16 %v270
    %v993 = vunpack.c.l.b16 %v271
    %v994 = vunpack.c.h.b16 %v271
    %v995 = vunpack.c.l.b16 %v272
    %v996 = vunpack.c.h.b16 %v272
    %v997 = vunpack.c.l.b16 %v273
    %v998 = vunpack.c.h.b16 %v273
    %v999 = vunpack.c.l.b16 %v274
    %v1000 = vunpack.c.h.b16 %v274
    %v1001 = vunpack.c.l.b16 %v275
    %v1002 = vunpack.c.h.b16 %v275
    %v1003 = vunpack.c.l.b16 %v276
    %v1004 = vunpack.c.h.b16 %v276
    %v1005 = vunpack.c.l.b16 %v277
    %v1006 = vunpack.c.h.b16 %v277
    %v1007 = vunpack.c.l.b16 %v278
    %v1008 = vunpack.c.h.b16 %v278
    %v1009 = vunpack.c.l.b16 %v279
    %v1010 = vunpack.c.h.b16 %v279
    %v1011 = vunpack.c.l.b16 %v280
    %v1012 = vunpack.c.h.b16 %v280
    %v1013 = vunpack.c.l.b16 %v281
    %v1014 = vunpack.c.h.b16 %v281
    %v1015 = vunpack.c.l.b16 %v282
    %v1016 = vunpack.c.h.b16 %v282
    %v1017 = vunpack.c.l.b16 %v283
    %v1018 = vunpack.c.h.b16 %v283
    %v1019 = vunpack.c.l.b16 %v284
    %v1020 = vunpack.c.h.b16 %v284
    %v1021 = vunpack.c.l.b16 %v285
    %v1022 = vunpack.c.h.b16 %v285
    %v1023 = vunpack.c.l.b16 %v286
    %v1024 = vunpack.c.h.b16 %v286
    %v1025 = vunpack.c.l.b16 %v287
    %v1026 = vunpack.c.h.b16 %v287
    %v1027 = vunpack.c.l.b16 %v288
    %v1028 = vunpack.c.h.b16 %v288
    %v1029 = vunpack.c.l.b16 %v289
    %v1030 = vunpack.c.h.b16 %v289
    %v1031 = vunpack.c.l.b16 %v290
    %v1032 = vunpack.c.h.b16 %v290
    %v1033 = vunpack.c.l.b16 %v291
    %v1034 = vunpack.c.h.b16 %v291
    %v1035 = vunpack.c.l.b16 %v292
    %v1036 = vunpack.c.h.b16 %v292
    %v1037 = vunpack.c.l.b16 %v293
    %v1038 = vunpack.c.h.b16 %v293
    %v1039 = vunpack.c.l.b16 %v294
    %v1040 = vunpack.c.h.b16 %v294
    %v1041 = vunpack.c.l.b16 %v295
    %v1042 = vunpack.c.h.b16 %v295
    %v1043 = vunpack.c.l.b16 %v296
    %v1044 = vunpack.c.h.b16 %v296
    %v1045 = vunpack.c.l.b16 %v297
    %v1046 = vunpack.c.h.b16 %v297
    %v1047 = vunpack.c.l.b16 %v298
    %v1048 = vunpack.c.h.b16 %v298
    %v1049 = vunpack.c.l.b16 %v299
    %v1050 = vunpack.c.h.b16 %v299
    %v1051 = vunpack.c.l.b16 %v300
    %v1052 = vunpack.c.h.b16 %v300
    %v1053 = vunpack.c.l.b16 %v301
    %v1054 = vunpack.c.h.b16 %v301
    %v1055 = vunpack.c.l.b16 %v302
    %v1056 = vunpack.c.h.b16 %v302
    %v1057 = vunpack.c.l.b16 %v303
    %v1058 = vunpack.c.h.b16 %v303
    %v1059 = vunpack.c.l.b16 %v304
    %v1060 = vunpack.c.h.b16 %v304
    %v1061 = vunpack.c.l.b16 %v305
    %v1062 = vunpack.c.h.b16 %v305
    %v1063 = vunpack.c.l.b16 %v306
    %v1064 = vunpack.c.h.b16 %v306
    %v1065 = vunpack.c.l.b16 %v307
    %v1066 = vunpack.c.h.b16 %v307
    %v1067 = vunpack.c.l.b16 %v308
    %v1068 = vunpack.c.h.b16 %v308
    %v1069 = vunpack.c.l.b16 %v309
    %v1070 = vunpack.c.h.b16 %v309
    %v1071 = vunpack.c.l.b16 %v310
    %v1072 = vunpack.c.h.b16 %v310
    %v1073 = vunpack.c.l.b16 %v311
    %v1074 = vunpack.c.h.b16 %v311
    %v1075 = vunpack.c.l.b16 %v312
    %v1076 = vunpack.c.h.b16 %v312
    %v1077 = vunpack.c.l.b16 %v313
    %v1078 = vunpack.c.h.b16 %v313
    %v1079 = vunpack.c.l.b16 %v314
    %v1080 = vunpack.c.h.b16 %v314
    %v1081 = vunpack.c.l.b16 %v315
    %v1082 = vunpack.c.h.b16 %v315
    %v1083 = vunpack.c.l.b16 %v316
    %v1084 = vunpack.c.h.b16 %v316
    %v1085 = vunpack.c.l.b16 %v317
    %v1086 = vunpack.c.h.b16 %v317
    %v1087 = vunpack.c.l.b16 %v318
    %v1088 = vunpack.c.h.b16 %v318
    %v1089 = vunpack.c.l.b16 %v319
    %v1090 = vunpack.c.h.b16 %v319
    %v1091 = vunpack.c.l.b16 %v320
    %v1092 = vunpack.c.h.b16 %v320
    %v1093 = vunpack.c.l.b16 %v321
    %v1094 = vunpack.c.h.b16 %v321
    %v1095 = vunpack.c.l.b16 %v322
    %v1096 = vunpack.c.h.b16 %v322
    %v1097 = vunpack.c.l.b16 %v323
    %v1098 = vunpack.c.h.b16 %v323
    %v1099 = vunpack.c.l.b16 %v324
    %v1100 = vunpack.c.h.b16 %v324
    %v1101 = vunpack.c.l.b16 %v325
    %v1102 = vunpack.c.h.b16 %v325
    %v1103 = vunpack.c.l.b16 %v326
    %v1104 = vunpack.c.h.b16 %v326
    %v1105 = vunpack.c.l.b16 %v327
    %v1106 = vunpack.c.h.b16 %v327
    %v1107 = vunpack.c.l.b16 %v328
    %v1108 = vunpack.c.h.b16 %v328
    %v1109 = vpack.c.b16 %v599, %v597
    %v1110 = vpack.c.b16 %v600, %v598
    %v1111 = vpack.c.b16 %v603, %v601
    %v1112 = vpack.c.b16 %v604, %v602
    %v1113 = vpack.c.b16 %v607, %v605
    %v1114 = vpack.c.b16 %v608, %v606
    %v1115 = vpack.c.b16 %v611, %v609
    %v1116 = vpack.c.b16 %v612, %v610
    %v1117 = vpack.c.b16 %v615, %v613
    %v1118 = vpack.c.b16 %v616, %v614
    %v1119 = vpack.c.b16 %v619, %v617
    %v1120 = vpack.c.b16 %v620, %v618
    %v1121 = vpack.c.b16 %v623, %v621
    %v1122 = vpack.c.b16 %v624, %v622
    %v1123 = vpack.c.b16 %v627, %v625
    %v1124 = vpack.c.b16 %v628, %v626
    %v1125 = vpack.c.b16 %v631, %v629
    %v1126 = vpack.c.b16 %v632, %v630
    %v1127 = vpack.c.b16 %v635, %v633
    %v1128 = vpack.c.b16 %v636, %v634
    %v1129 = vpack.c.b16 %v639, %v637
    %v1130 = vpack.c.b16 %v640, %v638
    %v1131 = vpack.c.b16 %v643, %v641
    %v1132 = vpack.c.b16 %v644, %v642
    %v1133 = vpack.c.b16 %v647, %v645
    %v1134 = vpack.c.b16 %v648, %v646
    %v1135 = vpack.c.b16 %v651, %v649
    %v1136 = vpack.c.b16 %v652, %v650
    %v1137 = vpack.c.b16 %v655, %v653
    %v1138 = vpack.c.b16 %v656, %v654
    %v1139 = vpack.c.b16 %v659, %v657
    %v1140 = vpack.c.b16 %v660, %v658
    %v1141 = vpack.c.b16 %v663, %v661
    %v1142 = vpack.c.b16 %v664, %v662
    %v1143 = vpack.c.b16 %v667, %v665
    %v1144 = vpack.c.b16 %v668, %v666
    %v1145 = vpack.c.b16 %v671, %v669
    %v1146 = vpack.c.b16 %v672, %v670
    %v1147 = vpack.c.b16 %v675, %v673
    %v1148 = vpack.c.b16 %v676, %v674
    %v1149 = vpack.c.b16 %v679, %v677
    %v1150 = vpack.c.b16 %v680, %v678
    %v1151 = vpack.c.b16 %v683, %v681
    %v1152 = vpack.c.b16 %v684, %v682
    %v1153 = vpack.c.b16 %v687, %v685
    %v1154 = vpack.c.b16 %v688, %v686
    %v1155 = vpack.c.b16 %v691, %v689
    %v1156 = vpack.c.b16 %v692, %v690
    %v1157 = vpack.c.b16 %v695, %v693
    %v1158 = vpack.c.b16 %v696, %v694
    %v1159 = vpack.c.b16 %v699, %v697
    %v1160 = vpack.c.b16 %v700, %v698
    %v1161 = vpack.c.b16 %v703, %v701
    %v1162 = vpack.c.b16 %v704, %v702
    %v1163 = vpack.c.b16 %v707, %v705
    %v1164 = vpack.c.b16 %v708, %v706
    %v1165 = vpack.c.b16 %v711, %v709
    %v1166 = vpack.c.b16 %v712, %v710
    %v1167 = vpack.c.b16 %v715, %v713
    %v1168 = vpack.c.b16 %v716, %v714
    %v1169 = vpack.c.b16 %v719, %v717
    %v1170 = vpack.c.b16 %v720, %v718
    %v1171 = vpack.c.b16 %v723, %v721
    %v1172 = vpack.c.b16 %v724, %v722
    %v1173 = vpack.c.b16 %v727, %v725
    %v1174 = vpack.c.b16 %v728, %v726
    %v1175 = vpack.c.b16 %v731, %v729
    %v1176 = vpack.c.b16 %v732, %v730
    %v1177 = vpack.c.b16 %v735, %v733
    %v1178 = vpack.c.b16 %v736, %v734
    %v1179 = vpack.c.b16 %v739, %v737
    %v1180 = vpack.c.b16 %v740, %v738
    %v1181 = vpack.c.b16 %v743, %v741
    %v1182 = vpack.c.b16 %v744, %v742
    %v1183 = vpack.c.b16 %v747, %v745
    %v1184 = vpack.c.b16 %v748, %v746
    %v1185 = vpack.c.b16 %v751, %v749
    %v1186 = vpack.c.b16 %v752, %v750
    %v1187 = vpack.c.b16 %v755, %v753
    %v1188 = vpack.c.b16 %v756, %v754
    %v1189 = vpack.c.b16 %v759, %v757
    %v1190 = vpack.c.b16 %v760, %v758
    %v1191 = vpack.c.b16 %v763, %v761
    %v1192 = vpack.c.b16 %v764, %v762
    %v1193 = vpack.c.b16 %v767, %v765
    %v1194 = vpack.c.b16 %v768, %v766
    %v1195 = vpack.c.b16 %v771, %v769
    %v1196 = vpack.c.b16 %v772, %v770
    %v1197 = vpack.c.b16 %v775, %v773
    %v1198 = vpack.c.b16 %v776, %v774
    %v1199 = vpack.c.b16 %v779, %v777
    %v1200 = vpack.c.b16 %v780, %v778
    %v1201 = vpack.c.b16 %v783, %v781
    %v1202 = vpack.c.b16 %v784, %v782
    %v1203 = vpack.c.b16 %v787, %v785
    %v1204 = vpack.c.b16 %v788, %v786
    %v1205 = vpack.c.b16 %v791, %v789
    %v1206 = vpack.c.b16 %v792, %v790
    %v1207 = vpack.c.b16 %v795, %v793
    %v1208 = vpack.c.b16 %v796, %v794
    %v1209 = vpack.c.b16 %v799, %v797
    %v1210 = vpack.c.b16 %v800, %v798
    %v1211 = vpack.c.b16 %v803, %v801
    %v1212 = vpack.c.b16 %v804, %v802
    %v1213 = vpack.c.b16 %v807, %v805
    %v1214 = vpack.c.b16 %v808, %v806
    %v1215 = vpack.c.b16 %v811, %v809
    %v1216 = vpack.c.b16 %v812, %v810
    %v1217 = vpack.c.b16 %v815, %v813
    %v1218 = vpack.c.b16 %v816, %v814
    %v1219 = vpack.c.b16 %v819, %v817
    %v1220 = vpack.c.b16 %v820, %v818
    %v1221 = vpack.c.b16 %v823, %v821
    %v1222 = vpack.c.b16 %v824, %v822
    %v1223 = vpack.c.b16 %v827, %v825
    %v1224 = vpack.c.b16 %v828, %v826
    %v1225 = vpack.c.b16 %v831, %v829
    %v1226 = vpack.c.b16 %v832, %v830
    %v1227 = vpack.c.b16 %v835, %v833
    %v1228 = vpack.c.b16 %v836, %v834
    %v1229 = vpack.c.b16 %v839, %v837
    %v1230 = vpack.c.b16 %v840, %v838
    %v1231 = vpack.c.b16 %v843, %v841
    %v1232 = vpack.c.b16 %v844, %v842
    %v1233 = vpack.c.b16 %v847, %v845
    %v1234 = vpack.c.b16 %v848, %v846
    %v1235 = vpack.c.b16 %v851, %v849
    %v1236 = vpack.c.b16 %v852, %v850
    %v1237 = vpack.c.b16 %v855, %v853
    %v1238 = vpack.c.b16 %v856, %v854
    %v1239 = vpack.c.b16 %v859, %v857
    %v1240 = vpack.c.b16 %v860, %v858
    %v1241 = vpack.c.b16 %v863, %v861
    %v1242 = vpack.c.b16 %v864, %v862
    %v1243 = vpack.c.b16 %v867, %v865
    %v1244 = vpack.c.b16 %v868, %v866
    %v1245 = vpack.c.b16 %v871, %v869
    %v1246 = vpack.c.b16 %v872, %v870
    %v1247 = vpack.c.b16 %v875, %v873
    %v1248 = vpack.c.b16 %v876, %v874
    %v1249 = vpack.c.b16 %v879, %v877
    %v1250 = vpack.c.b16 %v880, %v878
    %v1251 = vpack.c.b16 %v883, %v881
    %v1252 = vpack.c.b16 %v884, %v882
    %v1253 = vpack.c.b16 %v887, %v885
    %v1254 = vpack.c.b16 %v888, %v886
    %v1255 = vpack.c.b16 %v891, %v889
    %v1256 = vpack.c.b16 %v892, %v890
    %v1257 = vpack.c.b16 %v895, %v893
    %v1258 = vpack.c.b16 %v896, %v894
    %v1259 = vpack.c.b16 %v899, %v897
    %v1260 = vpack.c.b16 %v900, %v898
    %v1261 = vpack.c.b16 %v903, %v901
    %v1262 = vpack.c.b16 %v904, %v902
    %v1263 = vpack.c.b16 %v907, %v905
    %v1264 = vpack.c.b16 %v908, %v906
    %v1265 = vpack.c.b16 %v911, %v909
    %v1266 = vpack.c.b16 %v912, %v910
    %v1267 = vpack.c.b16 %v915, %v913
    %v1268 = vpack.c.b16 %v916, %v914
    %v1269 = vpack.c.b16 %v919, %v917
    %v1270 = vpack.c.b16 %v920, %v918
    %v1271 = vpack.c.b16 %v923, %v921
    %v1272 = vpack.c.b16 %v924, %v922
    %v1273 = vpack.c.b16 %v927, %v925
    %v1274 = vpack.c.b16 %v928, %v926
    %v1275 = vpack.c.b16 %v931, %v929
    %v1276 = vpack.c.b16 %v932, %v930
    %v1277 = vpack.c.b16 %v935, %v933
    %v1278 = vpack.c.b16 %v936, %v934
    %v1279 = vpack.c.b16 %v939, %v937
    %v1280 = vpack.c.b16 %v940, %v938
    %v1281 = vpack.c.b16 %v943, %v941
    %v1282 = vpack.c.b16 %v944, %v942
    %v1283 = vpack.c.b16 %v947, %v945
    %v1284 = vpack.c.b16 %v948, %v946
    %v1285 = vpack.c.b16 %v951, %v949
    %v1286 = vpack.c.b16 %v952, %v950
    %v1287 = vpack.c.b16 %v955, %v953
    %v1288 = vpack.c.b16 %v956, %v954
    %v1289 = vpack.c.b16 %v959, %v957
    %v1290 = vpack.c.b16 %v960, %v958
    %v1291 = vpack.c.b16 %v963, %v961
    %v1292 = vpack.c.b16 %v964, %v962
    %v1293 = vpack.c.b16 %v967, %v965
    %v1294 = vpack.c.b16 %v968, %v966
    %v1295 = vpack.c.b16 %v971, %v969
    %v1296 = vpack.c.b16 %v972, %v970
    %v1297 = vpack.c.b16 %v975, %v973
    %v1298 = vpack.c.b16 %v976, %v974
    %v1299 = vpack.c.b16 %v979, %v977
    %v1300 = vpack.c.b16 %v980, %v978
    %v1301 = vpack.c.b16 %v983, %v981
    %v1302 = vpack.c.b16 %v984, %v982
    %v1303 = vpack.c.b16 %v987, %v985
    %v1304 = vpack.c.b16 %v988, %v986
    %v1305 = vpack.c.b16 %v991, %v989
    %v1306 = vpack.c.b16 %v992, %v990
    %v1307 = vpack.c.b16 %v995, %v993
    %v1308 = vpack.c.b16 %v996, %v994
    %v1309 = vpack.c.b16 %v999, %v997
    %v1310 = vpack.c.b16 %v1000, %v998
    %v1311 = vpack.c.b16 %v1003, %v1001
    %v1312 = vpack.c.b16 %v1004, %v1002
    %v1313 = vpack.c.b16 %v1007, %v1005
    %v1314 = vpack.c.b16 %v1008, %v1006
    %v1315 = vpack.c.b16 %v1011, %v1009
    %v1316 = vpack.c.b16 %v1012, %v1010
    %v1317 = vpack.c.b16 %v1015, %v1013
    %v1318 = vpack.c.b16 %v1016, %v1014
    %v1319 = vpack.c.b16 %v1019, %v1017
    %v1320 = vpack.c.b16 %v1020, %v1018
    %v1321 = vpack.c.b16 %v1023, %v1021
    %v1322 = vpack.c.b16 %v1024, %v1022
    %v1323 = vpack.c.b16 %v1027, %v1025
    %v1324 = vpack.c.b16 %v1028, %v1026
    %v1325 = vpack.c.b16 %v1031, %v1029
    %v1326 = vpack.c.b16 %v1032, %v1030
    %v1327 = vpack.c.b16 %v1035, %v1033
    %v1328 = vpack.c.b16 %v1036, %v1034
    %v1329 = vpack.c.b16 %v1039, %v1037
    %v1330 = vpack.c.b16 %v1040, %v1038
    %v1331 = vpack.c.b16 %v1043, %v1041
    %v1332 = vpack.c.b16 %v1044, %v1042
    %v1333 = vpack.c.b16 %v1047, %v1045
    %v1334 = vpack.c.b16 %v1048, %v1046
    %v1335 = vpack.c.b16 %v1051, %v1049
    %v1336 = vpack.c.b16 %v1052, %v1050
    %v1337 = vpack.c.b16 %v1055, %v1053
    %v1338 = vpack.c.b16 %v1056, %v1054
    %v1339 = vpack.c.b16 %v1059, %v1057
    %v1340 = vpack.c.b16 %v1060, %v1058
    %v1341 = vpack.c.b16 %v1063, %v1061
    %v1342 = vpack.c.b16 %v1064, %v1062
    %v1343 = vpack.c.b16 %v1067, %v1065
    %v1344 = vpack.c.b16 %v1068, %v1066
    %v1345 = vpack.c.b16 %v1071, %v1069
    %v1346 = vpack.c.b16 %v1072, %v1070
    %v1347 = vpack.c.b16 %v1075, %v1073
    %v1348 = vpack.c.b16 %v1076, %v1074
    %v1349 = vpack.c.b16 %v1079, %v1077
    %v1350 = vpack.c.b16 %v1080, %v1078
    %v1351 = vpack.c.b16 %v1083, %v1081
    %v1352 = vpack.c.b16 %v1084, %v1082
    %v1353 = vpack.c.b16 %v1087, %v1085
    %v1354 = vpack.c.b16 %v1088, %v1086
    %v1355 = vpack.c.b16 %v1091, %v1089
    %v1356 = vpack.c.b16 %v1092, %v1090
    %v1357 = vpack.c.b16 %v1095, %v1093
    %v1358 = vpack.c.b16 %v1096, %v1094
    %v1359 = vpack.c.b16 %v1099, %v1097
    %v1360 = vpack.c.b16 %v1100, %v1098
    %v1361 = vpack.c.b16 %v1103, %v1101
    %v1362 = vpack.c.b16 %v1104, %v1102
    %v1363 = vpack.c.b16 %v1107, %v1105
    %v1364 = vpack.c.b16 %v1108, %v1106
    %1621 = vmatprep.subr.bf16.mxu0 %v1124
    %1622 = vmatpush1.bf16.msra.mxu0 %v1123
    %1623 = vmatprep.subr.bf16.mxu0 %v1122
    %1624 = vmatpush1.bf16.msra.mxu0 %v1121
    %1625 = vmatprep.subr.bf16.mxu0 %v1120
    %1626 = vmatpush1.bf16.msra.mxu0 %v1119
    %1627 = vmatprep.subr.bf16.mxu0 %v1118
    %1628 = vmatpush1.bf16.msra.mxu0 %v1117
    %1629 = vmatprep.subr.bf16.mxu0 %v1116
    %1630 = vmatpush1.bf16.msra.mxu0 %v1115
    %1631 = vmatprep.subr.bf16.mxu0 %v1114
    %1632 = vmatpush1.bf16.msra.mxu0 %v1113
    %1633 = vmatprep.subr.bf16.mxu0 %v1112
    %1634 = vmatpush1.bf16.msra.mxu0 %v1111
    %1635 = vmatprep.subr.bf16.mxu0 %v1110
    %1636 = vmatpush1.bf16.msra.mxu0 %v1109
    %1637 = vmatprep.subr.bf16.mxu0 %v1140
    %1638 = vmatpush2.bf16.msra.mxu0 %v1139
    %1639 = vmatprep.subr.bf16.mxu0 %v1138
    %1640 = vmatpush2.bf16.msra.mxu0 %v1137
    %1641 = vmatprep.subr.bf16.mxu0 %v1136
    %1642 = vmatpush2.bf16.msra.mxu0 %v1135
    %1643 = vmatprep.subr.bf16.mxu0 %v1134
    %1644 = vmatpush2.bf16.msra.mxu0 %v1133
    %1645 = vmatprep.subr.bf16.mxu0 %v1132
    %1646 = vmatpush2.bf16.msra.mxu0 %v1131
    %1647 = vmatprep.subr.bf16.mxu0 %v1130
    %1648 = vmatpush2.bf16.msra.mxu0 %v1129
    %1649 = vmatprep.subr.bf16.mxu0 %v1128
    %1650 = vmatpush2.bf16.msra.mxu0 %v1127
    %1651 = vmatprep.subr.bf16.mxu0 %v1126
    %1652 = vmatpush2.bf16.msra.mxu0 %v1125
    %1653 = vmatprep.mubr.bf16.mxu0 %v58
    %1654 = vmatmul.mubr.bf16.gmra.mxu0 %v57
    %v1655 = vpop.f32.mrf.mxu0
    %v1656 = vadd.f32 %v334, %v1655
    %v1657 = vpop.f32.mrf.mxu0
    %v1658 = vadd.f32 %v338, %v1657
    %v1659 = vpop.f32.mrf.mxu0
    %v1660 = vpop.f32.mrf.mxu0
    %1661 = vdwg.mxu0
    %1662 = vmatprep.subr.bf16.mxu0 %v1156
    %1663 = vmatpush1.bf16.msra.mxu0 %v1155
    %1664 = vmatprep.subr.bf16.mxu0 %v1154
    %1665 = vmatpush1.bf16.msra.mxu0 %v1153
    %1666 = vmatprep.subr.bf16.mxu0 %v1152
    %1667 = vmatpush1.bf16.msra.mxu0 %v1151
    %1668 = vmatprep.subr.bf16.mxu0 %v1150
    %1669 = vmatpush1.bf16.msra.mxu0 %v1149
    %1670 = vmatprep.subr.bf16.mxu0 %v1148
    %1671 = vmatpush1.bf16.msra.mxu0 %v1147
    %1672 = vmatprep.subr.bf16.mxu0 %v1146
    %1673 = vmatpush1.bf16.msra.mxu0 %v1145
    %1674 = vmatprep.subr.bf16.mxu0 %v1144
    %1675 = vmatpush1.bf16.msra.mxu0 %v1143
    %1676 = vmatprep.subr.bf16.mxu0 %v1142
    %1677 = vmatpush1.bf16.msra.mxu0 %v1141
    %1678 = vmatprep.subr.bf16.mxu0 %v1172
    %1679 = vmatpush2.bf16.msra.mxu0 %v1171
    %1680 = vmatprep.subr.bf16.mxu0 %v1170
    %1681 = vmatpush2.bf16.msra.mxu0 %v1169
    %1682 = vmatprep.subr.bf16.mxu0 %v1168
    %1683 = vmatpush2.bf16.msra.mxu0 %v1167
    %1684 = vmatprep.subr.bf16.mxu0 %v1166
    %1685 = vmatpush2.bf16.msra.mxu0 %v1165
    %1686 = vmatprep.subr.bf16.mxu0 %v1164
    %1687 = vmatpush2.bf16.msra.mxu0 %v1163
    %1688 = vmatprep.subr.bf16.mxu0 %v1162
    %1689 = vmatpush2.bf16.msra.mxu0 %v1161
    %1690 = vmatprep.subr.bf16.mxu0 %v1160
    %1691 = vmatpush2.bf16.msra.mxu0 %v1159
    %1692 = vmatprep.subr.bf16.mxu0 %v1158
    %1693 = vmatpush2.bf16.msra.mxu0 %v1157
    %1694 = vmatprep.mubr.bf16.mxu0 %v60
    %1695 = vmatmul.mubr.bf16.gmra.mxu0 %v59
    %v1696 = vpop.f32.mrf.mxu0
    %v1697 = vadd.f32 %v1656, %v1696
    %v1698 = vpop.f32.mrf.mxu0
    %v1699 = vadd.f32 %v1658, %v1698
    %v1700 = vpop.f32.mrf.mxu0
    %v1701 = vpop.f32.mrf.mxu0
    %1702 = vdwg.mxu0
    %1703 = vmatprep.subr.bf16.mxu0 %v1188
    %1704 = vmatpush1.bf16.msra.mxu0 %v1187
    %1705 = vmatprep.subr.bf16.mxu0 %v1186
    %1706 = vmatpush1.bf16.msra.mxu0 %v1185
    %1707 = vmatprep.subr.bf16.mxu0 %v1184
    %1708 = vmatpush1.bf16.msra.mxu0 %v1183
    %1709 = vmatprep.subr.bf16.mxu0 %v1182
    %1710 = vmatpush1.bf16.msra.mxu0 %v1181
    %1711 = vmatprep.subr.bf16.mxu0 %v1180
    %1712 = vmatpush1.bf16.msra.mxu0 %v1179
    %1713 = vmatprep.subr.bf16.mxu0 %v1178
    %1714 = vmatpush1.bf16.msra.mxu0 %v1177
    %1715 = vmatprep.subr.bf16.mxu0 %v1176
    %1716 = vmatpush1.bf16.msra.mxu0 %v1175
    %1717 = vmatprep.subr.bf16.mxu0 %v1174
    %1718 = vmatpush1.bf16.msra.mxu0 %v1173
    %1719 = vmatprep.subr.bf16.mxu0 %v1204
    %1720 = vmatpush2.bf16.msra.mxu0 %v1203
    %1721 = vmatprep.subr.bf16.mxu0 %v1202
    %1722 = vmatpush2.bf16.msra.mxu0 %v1201
    %1723 = vmatprep.subr.bf16.mxu0 %v1200
    %1724 = vmatpush2.bf16.msra.mxu0 %v1199
    %1725 = vmatprep.subr.bf16.mxu0 %v1198
    %1726 = vmatpush2.bf16.msra.mxu0 %v1197
    %1727 = vmatprep.subr.bf16.mxu0 %v1196
    %1728 = vmatpush2.bf16.msra.mxu0 %v1195
    %1729 = vmatprep.subr.bf16.mxu0 %v1194
    %1730 = vmatpush2.bf16.msra.mxu0 %v1193
    %1731 = vmatprep.subr.bf16.mxu0 %v1192
    %1732 = vmatpush2.bf16.msra.mxu0 %v1191
    %1733 = vmatprep.subr.bf16.mxu0 %v1190
    %1734 = vmatpush2.bf16.msra.mxu0 %v1189
    %1735 = vmatprep.mubr.bf16.mxu0 %v62
    %1736 = vmatmul.mubr.bf16.gmra.mxu0 %v61
    %v1737 = vpop.f32.mrf.mxu0
    %v1738 = vadd.f32 %v1697, %v1737
    %v1739 = vpop.f32.mrf.mxu0
    %v1740 = vadd.f32 %v1699, %v1739
    %v1741 = vpop.f32.mrf.mxu0
    %v1742 = vpop.f32.mrf.mxu0
    %1743 = vdwg.mxu0
    %1744 = vmatprep.subr.bf16.mxu0 %v1220
    %1745 = vmatpush1.bf16.msra.mxu0 %v1219
    %1746 = vmatprep.subr.bf16.mxu0 %v1218
    %1747 = vmatpush1.bf16.msra.mxu0 %v1217
    %1748 = vmatprep.subr.bf16.mxu0 %v1216
    %1749 = vmatpush1.bf16.msra.mxu0 %v1215
    %1750 = vmatprep.subr.bf16.mxu0 %v1214
    %1751 = vmatpush1.bf16.msra.mxu0 %v1213
    %1752 = vmatprep.subr.bf16.mxu0 %v1212
    %1753 = vmatpush1.bf16.msra.mxu0 %v1211
    %1754 = vmatprep.subr.bf16.mxu0 %v1210
    %1755 = vmatpush1.bf16.msra.mxu0 %v1209
    %1756 = vmatprep.subr.bf16.mxu0 %v1208
    %1757 = vmatpush1.bf16.msra.mxu0 %v1207
    %1758 = vmatprep.subr.bf16.mxu0 %v1206
    %1759 = vmatpush1.bf16.msra.mxu0 %v1205
    %1760 = vmatprep.subr.bf16.mxu0 %v1236
    %1761 = vmatpush2.bf16.msra.mxu0 %v1235
    %1762 = vmatprep.subr.bf16.mxu0 %v1234
    %1763 = vmatpush2.bf16.msra.mxu0 %v1233
    %1764 = vmatprep.subr.bf16.mxu0 %v1232
    %1765 = vmatpush2.bf16.msra.mxu0 %v1231
    %1766 = vmatprep.subr.bf16.mxu0 %v1230
    %1767 = vmatpush2.bf16.msra.mxu0 %v1229
    %1768 = vmatprep.subr.bf16.mxu0 %v1228
    %1769 = vmatpush2.bf16.msra.mxu0 %v1227
    %1770 = vmatprep.subr.bf16.mxu0 %v1226
    %1771 = vmatpush2.bf16.msra.mxu0 %v1225
    %1772 = vmatprep.subr.bf16.mxu0 %v1224
    %1773 = vmatpush2.bf16.msra.mxu0 %v1223
    %1774 = vmatprep.subr.bf16.mxu0 %v1222
    %1775 = vmatpush2.bf16.msra.mxu0 %v1221
    %1776 = vmatprep.mubr.bf16.mxu0 %v64
    %1777 = vmatmul.mubr.bf16.gmra.mxu0 %v63
    %v1778 = vpop.f32.mrf.mxu0
    %v1779 = vadd.f32 %v1738, %v1778
    %v1780 = vpop.f32.mrf.mxu0
    %v1781 = vadd.f32 %v1740, %v1780
    %v1782 = vpop.f32.mrf.mxu0
    %v1783 = vpop.f32.mrf.mxu0
    %1784 = vdwg.mxu0
    %1785 = vmatprep.subr.bf16.mxu0 %v1252
    %1786 = vmatpush1.bf16.msra.mxu0 %v1251
    %1787 = vmatprep.subr.bf16.mxu0 %v1250
    %1788 = vmatpush1.bf16.msra.mxu0 %v1249
    %1789 = vmatprep.subr.bf16.mxu0 %v1248
    %1790 = vmatpush1.bf16.msra.mxu0 %v1247
    %1791 = vmatprep.subr.bf16.mxu0 %v1246
    %1792 = vmatpush1.bf16.msra.mxu0 %v1245
    %1793 = vmatprep.subr.bf16.mxu0 %v1244
    %1794 = vmatpush1.bf16.msra.mxu0 %v1243
    %1795 = vmatprep.subr.bf16.mxu0 %v1242
    %1796 = vmatpush1.bf16.msra.mxu0 %v1241
    %1797 = vmatprep.subr.bf16.mxu0 %v1240
    %1798 = vmatpush1.bf16.msra.mxu0 %v1239
    %1799 = vmatprep.subr.bf16.mxu0 %v1238
    %1800 = vmatpush1.bf16.msra.mxu0 %v1237
    %1801 = vmatprep.subr.bf16.mxu0 %v1268
    %1802 = vmatpush2.bf16.msra.mxu0 %v1267
    %1803 = vmatprep.subr.bf16.mxu0 %v1266
    %1804 = vmatpush2.bf16.msra.mxu0 %v1265
    %1805 = vmatprep.subr.bf16.mxu0 %v1264
    %1806 = vmatpush2.bf16.msra.mxu0 %v1263
    %1807 = vmatprep.subr.bf16.mxu0 %v1262
    %1808 = vmatpush2.bf16.msra.mxu0 %v1261
    %1809 = vmatprep.subr.bf16.mxu0 %v1260
    %1810 = vmatpush2.bf16.msra.mxu0 %v1259
    %1811 = vmatprep.subr.bf16.mxu0 %v1258
    %1812 = vmatpush2.bf16.msra.mxu0 %v1257
    %1813 = vmatprep.subr.bf16.mxu0 %v1256
    %1814 = vmatpush2.bf16.msra.mxu0 %v1255
    %1815 = vmatprep.subr.bf16.mxu0 %v1254
    %1816 = vmatpush2.bf16.msra.mxu0 %v1253
    %1817 = vmatprep.mubr.bf16.mxu0 %v66
    %1818 = vmatmul.mubr.bf16.gmra.mxu0 %v65
    %v1819 = vpop.f32.mrf.mxu0
    %v1820 = vadd.f32 %v1779, %v1819
    %v1821 = vpop.f32.mrf.mxu0
    %v1822 = vadd.f32 %v1781, %v1821
    %v1823 = vpop.f32.mrf.mxu0
    %v1824 = vpop.f32.mrf.mxu0
    %1825 = vdwg.mxu0
    %1826 = vmatprep.subr.bf16.mxu0 %v1284
    %1827 = vmatpush1.bf16.msra.mxu0 %v1283
    %1828 = vmatprep.subr.bf16.mxu0 %v1282
    %1829 = vmatpush1.bf16.msra.mxu0 %v1281
    %1830 = vmatprep.subr.bf16.mxu0 %v1280
    %1831 = vmatpush1.bf16.msra.mxu0 %v1279
    %1832 = vmatprep.subr.bf16.mxu0 %v1278
    %1833 = vmatpush1.bf16.msra.mxu0 %v1277
    %1834 = vmatprep.subr.bf16.mxu0 %v1276
    %1835 = vmatpush1.bf16.msra.mxu0 %v1275
    %1836 = vmatprep.subr.bf16.mxu0 %v1274
    %1837 = vmatpush1.bf16.msra.mxu0 %v1273
    %1838 = vmatprep.subr.bf16.mxu0 %v1272
    %1839 = vmatpush1.bf16.msra.mxu0 %v1271
    %1840 = vmatprep.subr.bf16.mxu0 %v1270
    %1841 = vmatpush1.bf16.msra.mxu0 %v1269
    %1842 = vmatprep.subr.bf16.mxu0 %v1300
    %1843 = vmatpush2.bf16.msra.mxu0 %v1299
    %1844 = vmatprep.subr.bf16.mxu0 %v1298
    %1845 = vmatpush2.bf16.msra.mxu0 %v1297
    %1846 = vmatprep.subr.bf16.mxu0 %v1296
    %1847 = vmatpush2.bf16.msra.mxu0 %v1295
    %1848 = vmatprep.subr.bf16.mxu0 %v1294
    %1849 = vmatpush2.bf16.msra.mxu0 %v1293
    %1850 = vmatprep.subr.bf16.mxu0 %v1292
    %1851 = vmatpush2.bf16.msra.mxu0 %v1291
    %1852 = vmatprep.subr.bf16.mxu0 %v1290
    %1853 = vmatpush2.bf16.msra.mxu0 %v1289
    %1854 = vmatprep.subr.bf16.mxu0 %v1288
    %1855 = vmatpush2.bf16.msra.mxu0 %v1287
    %1856 = vmatprep.subr.bf16.mxu0 %v1286
    %1857 = vmatpush2.bf16.msra.mxu0 %v1285
    %1858 = vmatprep.mubr.bf16.mxu0 %v68
    %1859 = vmatmul.mubr.bf16.gmra.mxu0 %v67
    %v1860 = vpop.f32.mrf.mxu0
    %v1861 = vadd.f32 %v1820, %v1860
    %v1862 = vpop.f32.mrf.mxu0
    %v1863 = vadd.f32 %v1822, %v1862
    %v1864 = vpop.f32.mrf.mxu0
    %v1865 = vpop.f32.mrf.mxu0
    %1866 = vdwg.mxu0
    %1867 = vmatprep.subr.bf16.mxu0 %v1316
    %1868 = vmatpush1.bf16.msra.mxu0 %v1315
    %1869 = vmatprep.subr.bf16.mxu0 %v1314
    %1870 = vmatpush1.bf16.msra.mxu0 %v1313
    %1871 = vmatprep.subr.bf16.mxu0 %v1312
    %1872 = vmatpush1.bf16.msra.mxu0 %v1311
    %1873 = vmatprep.subr.bf16.mxu0 %v1310
    %1874 = vmatpush1.bf16.msra.mxu0 %v1309
    %1875 = vmatprep.subr.bf16.mxu0 %v1308
    %1876 = vmatpush1.bf16.msra.mxu0 %v1307
    %1877 = vmatprep.subr.bf16.mxu0 %v1306
    %1878 = vmatpush1.bf16.msra.mxu0 %v1305
    %1879 = vmatprep.subr.bf16.mxu0 %v1304
    %1880 = vmatpush1.bf16.msra.mxu0 %v1303
    %1881 = vmatprep.subr.bf16.mxu0 %v1302
    %1882 = vmatpush1.bf16.msra.mxu0 %v1301
    %1883 = vmatprep.subr.bf16.mxu0 %v1332
    %1884 = vmatpush2.bf16.msra.mxu0 %v1331
    %1885 = vmatprep.subr.bf16.mxu0 %v1330
    %1886 = vmatpush2.bf16.msra.mxu0 %v1329
    %1887 = vmatprep.subr.bf16.mxu0 %v1328
    %1888 = vmatpush2.bf16.msra.mxu0 %v1327
    %1889 = vmatprep.subr.bf16.mxu0 %v1326
    %1890 = vmatpush2.bf16.msra.mxu0 %v1325
    %1891 = vmatprep.subr.bf16.mxu0 %v1324
    %1892 = vmatpush2.bf16.msra.mxu0 %v1323
    %1893 = vmatprep.subr.bf16.mxu0 %v1322
    %1894 = vmatpush2.bf16.msra.mxu0 %v1321
    %1895 = vmatprep.subr.bf16.mxu0 %v1320
    %1896 = vmatpush2.bf16.msra.mxu0 %v1319
    %1897 = vmatprep.subr.bf16.mxu0 %v1318
    %1898 = vmatpush2.bf16.msra.mxu0 %v1317
    %1899 = vmatprep.mubr.bf16.mxu0 %v70
    %1900 = vmatmul.mubr.bf16.gmra.mxu0 %v69
    %v1901 = vpop.f32.mrf.mxu0
    %v1902 = vadd.f32 %v1861, %v1901
    %v1903 = vpop.f32.mrf.mxu0
    %v1904 = vadd.f32 %v1863, %v1903
    %v1905 = vpop.f32.mrf.mxu0
    %v1906 = vpop.f32.mrf.mxu0
    %1907 = vdwg.mxu0
    %1908 = vmatprep.subr.bf16.mxu0 %v1348
    %1909 = vmatpush1.bf16.msra.mxu0 %v1347
    %1910 = vmatprep.subr.bf16.mxu0 %v1346
    %1911 = vmatpush1.bf16.msra.mxu0 %v1345
    %1912 = vmatprep.subr.bf16.mxu0 %v1344
    %1913 = vmatpush1.bf16.msra.mxu0 %v1343
    %1914 = vmatprep.subr.bf16.mxu0 %v1342
    %1915 = vmatpush1.bf16.msra.mxu0 %v1341
    %1916 = vmatprep.subr.bf16.mxu0 %v1340
    %1917 = vmatpush1.bf16.msra.mxu0 %v1339
    %1918 = vmatprep.subr.bf16.mxu0 %v1338
    %1919 = vmatpush1.bf16.msra.mxu0 %v1337
    %1920 = vmatprep.subr.bf16.mxu0 %v1336
    %1921 = vmatpush1.bf16.msra.mxu0 %v1335
    %1922 = vmatprep.subr.bf16.mxu0 %v1334
    %1923 = vmatpush1.bf16.msra.mxu0 %v1333
    %1924 = vmatprep.subr.bf16.mxu0 %v1364
    %1925 = vmatpush2.bf16.msra.mxu0 %v1363
    %1926 = vmatprep.subr.bf16.mxu0 %v1362
    %1927 = vmatpush2.bf16.msra.mxu0 %v1361
    %1928 = vmatprep.subr.bf16.mxu0 %v1360
    %1929 = vmatpush2.bf16.msra.mxu0 %v1359
    %1930 = vmatprep.subr.bf16.mxu0 %v1358
    %1931 = vmatpush2.bf16.msra.mxu0 %v1357
    %1932 = vmatprep.subr.bf16.mxu0 %v1356
    %1933 = vmatpush2.bf16.msra.mxu0 %v1355
    %1934 = vmatprep.subr.bf16.mxu0 %v1354
    %1935 = vmatpush2.bf16.msra.mxu0 %v1353
    %1936 = vmatprep.subr.bf16.mxu0 %v1352
    %1937 = vmatpush2.bf16.msra.mxu0 %v1351
    %1938 = vmatprep.subr.bf16.mxu0 %v1350
    %1939 = vmatpush2.bf16.msra.mxu0 %v1349
    %1940 = vmatprep.mubr.bf16.mxu0 %v72
    %1941 = vmatmul.mubr.bf16.gmra.mxu0 %v71
    %v1942 = vpop.f32.mrf.mxu0
    %v1943 = vadd.f32 %v1902, %v1942
    %v1944 = vpop.f32.mrf.mxu0
    %v1945 = vadd.f32 %v1904, %v1944
    %v1946 = vpop.f32.mrf.mxu0
    %v1947 = vpop.f32.mrf.mxu0
    %1948 = vdwg.mxu0
    %v1949 = vmax.f32 %v1943, 0.0
    %v1950 = vmax.f32 %v1945, 0.0
    %v1951 = vpack.c.bf16 %v1949, %v1949
    %v1952 = vpack.c.bf16 %v1950, %v1950
    %v1953 = vld [vmem:[%s3] sm:$0xf]
    %v1954 = vld [vmem:[%s3 + $0x4] sm:$0xf]
    %v1955 = vld [vmem:[%s3 + $0x8] sm:$0xf]
    %v1956 = vld [vmem:[%s3 + $0xc] sm:$0xf]
    %v1957 = vld [vmem:[%s3 + $0x10] sm:$0xf]
    %v1958 = vld [vmem:[%s3 + $0x14] sm:$0xf]
    %v1959 = vld [vmem:[%s3 + $0x18] sm:$0xf]
    %v1960 = vld [vmem:[%s3 + $0x1c] sm:$0xf]
    %v1961 = vld [vmem:[%s3 + $0x20] sm:$0xf]
    %v1962 = vld [vmem:[%s3 + $0x24] sm:$0xf]
    %v1963 = vld [vmem:[%s3 + $0x28] sm:$0xf]
    %v1964 = vld [vmem:[%s3 + $0x2c] sm:$0xf]
    %v1965 = vld [vmem:[%s3 + $0x30] sm:$0xf]
    %v1966 = vld [vmem:[%s3 + $0x34] sm:$0xf]
    %v1967 = vld [vmem:[%s3 + $0x38] sm:$0xf]
    %v1968 = vld [vmem:[%s3 + $0x3c] sm:$0xf]
    %v1969 = vld [vmem:[%s3 + $0x40] sm:$0xf]
    %v1970 = vld [vmem:[%s3 + $0x44] sm:$0xf]
    %v1971 = vld [vmem:[%s3 + $0x48] sm:$0xf]
    %v1972 = vld [vmem:[%s3 + $0x4c] sm:$0xf]
    %v1973 = vld [vmem:[%s3 + $0x50] sm:$0xf]
    %v1974 = vld [vmem:[%s3 + $0x54] sm:$0xf]
    %v1975 = vld [vmem:[%s3 + $0x58] sm:$0xf]
    %v1976 = vld [vmem:[%s3 + $0x5c] sm:$0xf]
    %v1977 = vld [vmem:[%s3 + $0x60] sm:$0xf]
    %v1978 = vld [vmem:[%s3 + $0x64] sm:$0xf]
    %v1979 = vld [vmem:[%s3 + $0x68] sm:$0xf]
    %v1980 = vld [vmem:[%s3 + $0x6c] sm:$0xf]
    %v1981 = vld [vmem:[%s3 + $0x70] sm:$0xf]
    %v1982 = vld [vmem:[%s3 + $0x74] sm:$0xf]
    %v1983 = vld [vmem:[%s3 + $0x78] sm:$0xf]
    %v1984 = vld [vmem:[%s3 + $0x7c] sm:$0xf]
    %v1985 = vld [vmem:[%s4] sm:$0x1]
    %v1987 = vlaneseq
    %v1988 = vshrl.u32 %v1987, 7
    %v1989 = vsub.s32 0, %v1988
    %v1990 = vrot.slane %v1985, %v1989
    %v2024 = vunpack.c.l.b16 %v1953
    %v2025 = vunpack.c.l.b16 %v1954
    %v2026 = vunpack.c.l.b16 %v1955
    %v2027 = vunpack.c.l.b16 %v1956
    %v2028 = vunpack.c.l.b16 %v1957
    %v2029 = vunpack.c.l.b16 %v1958
    %v2030 = vunpack.c.l.b16 %v1959
    %v2031 = vunpack.c.l.b16 %v1960
    %v2032 = vunpack.c.l.b16 %v1961
    %v2033 = vunpack.c.l.b16 %v1962
    %v2034 = vunpack.c.l.b16 %v1963
    %v2035 = vunpack.c.l.b16 %v1964
    %v2036 = vunpack.c.l.b16 %v1965
    %v2037 = vunpack.c.l.b16 %v1966
    %v2038 = vunpack.c.l.b16 %v1967
    %v2039 = vunpack.c.l.b16 %v1968
    %v2040 = vunpack.c.l.b16 %v1969
    %v2041 = vunpack.c.l.b16 %v1970
    %v2042 = vunpack.c.l.b16 %v1971
    %v2043 = vunpack.c.l.b16 %v1972
    %v2044 = vunpack.c.l.b16 %v1973
    %v2045 = vunpack.c.l.b16 %v1974
    %v2046 = vunpack.c.l.b16 %v1975
    %v2047 = vunpack.c.l.b16 %v1976
    %v2048 = vunpack.c.l.b16 %v1977
    %v2049 = vunpack.c.l.b16 %v1978
    %v2050 = vunpack.c.l.b16 %v1979
    %v2051 = vunpack.c.l.b16 %v1980
    %v2052 = vunpack.c.l.b16 %v1981
    %v2053 = vunpack.c.l.b16 %v1982
    %v2054 = vunpack.c.l.b16 %v1983
    %v2055 = vunpack.c.l.b16 %v1984
    %v2056 = vpack.c.b16 %v2025, %v2024
    %v2057 = vpack.c.b16 %v2027, %v2026
    %v2058 = vpack.c.b16 %v2029, %v2028
    %v2059 = vpack.c.b16 %v2031, %v2030
    %v2060 = vpack.c.b16 %v2033, %v2032
    %v2061 = vpack.c.b16 %v2035, %v2034
    %v2062 = vpack.c.b16 %v2037, %v2036
    %v2063 = vpack.c.b16 %v2039, %v2038
    %v2064 = vpack.c.b16 %v2041, %v2040
    %v2065 = vpack.c.b16 %v2043, %v2042
    %v2066 = vpack.c.b16 %v2045, %v2044
    %v2067 = vpack.c.b16 %v2047, %v2046
    %v2068 = vpack.c.b16 %v2049, %v2048
    %v2069 = vpack.c.b16 %v2051, %v2050
    %v2070 = vpack.c.b16 %v2053, %v2052
    %v2071 = vpack.c.b16 %v2055, %v2054
    %2088 = vmatprep.subr.bf16.mxu0 0
    %2089 = vmatpush1.bf16.msra.mxu0 %v2063
    %2090 = vmatprep.subr.bf16.mxu0 0
    %2091 = vmatpush1.bf16.msra.mxu0 %v2062
    %2092 = vmatprep.subr.bf16.mxu0 0
    %2093 = vmatpush1.bf16.msra.mxu0 %v2061
    %2094 = vmatprep.subr.bf16.mxu0 0
    %2095 = vmatpush1.bf16.msra.mxu0 %v2060
    %2096 = vmatprep.subr.bf16.mxu0 0
    %2097 = vmatpush1.bf16.msra.mxu0 %v2059
    %2098 = vmatprep.subr.bf16.mxu0 0
    %2099 = vmatpush1.bf16.msra.mxu0 %v2058
    %2100 = vmatprep.subr.bf16.mxu0 0
    %2101 = vmatpush1.bf16.msra.mxu0 %v2057
    %2102 = vmatprep.subr.bf16.mxu0 0
    %2103 = vmatpush1.bf16.msra.mxu0 %v2056
    %2104 = vmatprep.subr.bf16.mxu0 0
    %2105 = vmatpush2.bf16.msra.mxu0 %v2071
    %2106 = vmatprep.subr.bf16.mxu0 0
    %2107 = vmatpush2.bf16.msra.mxu0 %v2070
    %2108 = vmatprep.subr.bf16.mxu0 0
    %2109 = vmatpush2.bf16.msra.mxu0 %v2069
    %2110 = vmatprep.subr.bf16.mxu0 0
    %2111 = vmatpush2.bf16.msra.mxu0 %v2068
    %2112 = vmatprep.subr.bf16.mxu0 0
    %2113 = vmatpush2.bf16.msra.mxu0 %v2067
    %2114 = vmatprep.subr.bf16.mxu0 0
    %2115 = vmatpush2.bf16.msra.mxu0 %v2066
    %2116 = vmatprep.subr.bf16.mxu0 0
    %2117 = vmatpush2.bf16.msra.mxu0 %v2065
    %2118 = vmatprep.subr.bf16.mxu0 0
    %2119 = vmatpush2.bf16.msra.mxu0 %v2064
    %2120 = vmatprep.mubr.bf16.mxu0 %v1952
    %2121 = vmatmul.mubr.bf16.gmra.mxu0 %v1951
    %v2122 = vpop.f32.mrf.mxu0
    %v2123 = vadd.f32 %v1990, %v2122
    %v2124 = vpop.f32.mrf.mxu0
    %v2125 = vpop.f32.mrf.mxu0
    %v2126 = vpop.f32.mrf.mxu0
    %2127 = vdwg.mxu0
    %v2128 = vmax.f32 %v2123, 0.0
    %v2129 = vpack.c.bf16 %v2128, %v2128
    %v2130 = vld [vmem:[%s5] sm:$0xf]
    %v2131 = vld [vmem:[%s5 + $0x4] sm:$0xf]
    %v2132 = vld [vmem:[%s5 + $0x8] sm:$0xf]
    %v2133 = vld [vmem:[%s5 + $0xc] sm:$0xf]
    %v2134 = vld [vmem:[%s5 + $0x10] sm:$0xf]
    %v2135 = vld [vmem:[%s5 + $0x14] sm:$0xf]
    %v2136 = vld [vmem:[%s5 + $0x18] sm:$0xf]
    %v2137 = vld [vmem:[%s5 + $0x1c] sm:$0xf]
    %v2138 = vld [vmem:[%s6] sm:$0x1]
    %v2140 = vlaneseq
    %v2141 = vshrl.u32 %v2140, 7
    %v2142 = vsub.s32 0, %v2141
    %v2143 = vrot.slane %v2138, %v2142
    %v2153 = vunpack.c.l.b16 %v2130
    %v2154 = vunpack.c.l.b16 %v2131
    %v2155 = vunpack.c.l.b16 %v2132
    %v2156 = vunpack.c.l.b16 %v2133
    %v2157 = vunpack.c.l.b16 %v2134
    %v2158 = vunpack.c.l.b16 %v2135
    %v2159 = vunpack.c.l.b16 %v2136
    %v2160 = vunpack.c.l.b16 %v2137
    %v2161 = vpack.c.b16 %v2154, %v2153
    %v2162 = vpack.c.b16 %v2156, %v2155
    %v2163 = vpack.c.b16 %v2158, %v2157
    %v2164 = vpack.c.b16 %v2160, %v2159
    %vm2169 = vcmask 523264
    %v2171 = vsel %vm2169, %v2129, 0
    %2173 = vmatprep.subr.bf16.mxu0 0
    %2174 = vmatpush1.bf16.msra.mxu0 0
    %2175 = vmatprep.subr.bf16.mxu0 0
    %2176 = vmatpush1.bf16.msra.mxu0 0
    %2177 = vmatprep.subr.bf16.mxu0 0
    %2178 = vmatpush1.bf16.msra.mxu0 0
    %2179 = vmatprep.subr.bf16.mxu0 0
    %2180 = vmatpush1.bf16.msra.mxu0 0
    %2181 = vmatprep.subr.bf16.mxu0 0
    %2182 = vmatpush1.bf16.msra.mxu0 %v2164
    %2183 = vmatprep.subr.bf16.mxu0 0
    %2184 = vmatpush1.bf16.msra.mxu0 %v2163
    %2185 = vmatprep.subr.bf16.mxu0 0
    %2186 = vmatpush1.bf16.msra.mxu0 %v2162
    %2187 = vmatprep.subr.bf16.mxu0 0
    %2188 = vmatpush1.bf16.msra.mxu0 %v2161
    %2189 = vmatprep.subr.bf16.mxu0 0
    %2190 = vmatpush2.bf16.msra.mxu0 0
    %2191 = vmatprep.subr.bf16.mxu0 0
    %2192 = vmatpush2.bf16.msra.mxu0 0
    %2193 = vmatprep.subr.bf16.mxu0 0
    %2194 = vmatpush2.bf16.msra.mxu0 0
    %2195 = vmatprep.subr.bf16.mxu0 0
    %2196 = vmatpush2.bf16.msra.mxu0 0
    %2197 = vmatprep.subr.bf16.mxu0 0
    %2198 = vmatpush2.bf16.msra.mxu0 0
    %2199 = vmatprep.subr.bf16.mxu0 0
    %2200 = vmatpush2.bf16.msra.mxu0 0
    %2201 = vmatprep.subr.bf16.mxu0 0
    %2202 = vmatpush2.bf16.msra.mxu0 0
    %2203 = vmatprep.subr.bf16.mxu0 0
    %2204 = vmatpush2.bf16.msra.mxu0 0
    %2205 = vmatprep.mubr.bf16.mxu0 0
    %2206 = vmatmul.mubr.bf16.gmra.mxu0 %v2171
    %v2207 = vpop.f32.mrf.mxu0
    %v2208 = vadd.f32 %v2143, %v2207
    %v2209 = vpop.f32.mrf.mxu0
    %v2210 = vpop.f32.mrf.mxu0
    %v2211 = vpop.f32.mrf.mxu0
    %2212 = vdwg.mxu0
    %vm2213 = vcmask 15360
    %v2214 = vsel %vm2213, %v2208, -inf
    %2215 = vmax.xlane.f32.xlu0 %v2214
    %v2216 = vpop.xlane.xlu0 %2215
    %v2217 = vsub.f32 %v2208, %v2216
    %v2218 = vmul.f32 %v2217, 1.442695
    %v2219 = vpow.pop %v2218
    %v2220 = vsel %vm2213, %v2219, 0.0
    %2221 = vadd.xlane.f32.xlu0 %v2220
    %v2222 = vpop.xlane.xlu0 %2221
    %v2223 = vrcp.pop %v2222
    %v2224 = vmul.f32 %v2219, %v2223
    %2225 = vst.msk [vmem:[%s7] sm:$0xff] %vm2213, %v2224
    // Predicated region
    $region34: #{tpu_custom_call.1} parent=1 // pred_check
      _
    $region35: #{tpu_custom_call.1} parent=1 // pred_check_branch
      %2227 = sbr.rel (0) target = $region37
    $region36: #{tpu_custom_call.1} parent=1 // pred_region
      _
    $region37: #{tpu_custom_call.1} parent=1 // pred_fallthru
      _
    // Predicated region
    $region38: #{tpu_custom_call.1} parent=1 // pred_check
      _
    $region39: #{tpu_custom_call.1} parent=1 // pred_check_branch
      %2229 = sbr.rel (0) target = $region41
    $region40: #{tpu_custom_call.1} parent=1 // pred_region
      _
    $region41: #{tpu_custom_call.1} parent=1 // pred_fallthru
      _
    %2230 = vsyncpa [#allocation3], 1

</llo_original>
